<compile_context>
chip_gen: v7x
topology: tpu7x:2x2x1
jax: 0.10.0
libtpu: 0.0.40
codegen_flags: <defaults>
</compile_context>

<pallas_src>
import jax
import jax.numpy as jnp
from jax.experimental import pallas as pl
from jax.experimental.pallas import tpu as pltpu

EPS = 1e-3


def _fused_kernel(x_ref, s_ref, w_ref, gamma_ref, beta_ref, o_ref):
    # x_ref:     (Cin, M)    f32   input, channels-first, spatial flattened
    # s_ref:     (1, Cin)    f32   per-channel scale (the [1,768,1,1] tensor)
    # w_ref:     (Cout, Cin) f32   1x1 conv weight
    # gamma_ref: (Cout, 1)   f32   BN affine scale
    # beta_ref:  (Cout, 1)   f32   BN affine shift
    # o_ref:     (Cout, M)   f32
    # Fold scale into the weight (VPU, 192x768, hidden under input DMA); cast
    # both MXU operands to bf16, accumulate in f32.
    wb = (w_ref[...] * s_ref[...]).astype(jnp.bfloat16)         # (Cout, Cin)
    xb = x_ref[...].astype(jnp.bfloat16)                        # (Cin, M)
    y = jnp.dot(wb, xb, preferred_element_type=jnp.float32)     # (Cout, M) MXU

    # BatchNorm2d train-mode normalization: biased stats over the M spatial
    # positions (lane-axis XLU reduction), single pass in f32.
    inv_m = 1.0 / y.shape[1]
    mean = jnp.sum(y, axis=1, keepdims=True) * inv_m            # (Cout, 1)
    var = jnp.sum(y * y, axis=1, keepdims=True) * inv_m - mean * mean
    scale = jax.lax.rsqrt(var + EPS) * gamma_ref[...]           # (Cout, 1)
    o_ref[...] = (y - mean) * scale + beta_ref[...]


@jax.jit
def fused_mul_conv_bn(x_nchw, scale_nc11, w_oihw, gamma, beta):
    """x_nchw: (1, Cin, H, W); scale_nc11: (1, Cin, 1, 1);
       w_oihw: (Cout, Cin, 1, 1); gamma/beta: (Cout,). Returns (1, Cout, H, W)."""
    N, Cin, H, W = x_nchw.shape
    Cout = w_oihw.shape[0]
    assert N == 1, "channels-first free-reshape path assumes N == 1"
    M = H * W

    # All glue below is layout-free (contiguous reshapes of NCHW data, no
    # transposes, no dtype conversions of the big activation tensor).
    x2d = x_nchw.reshape(Cin, M).astype(jnp.float32)
    s2d = scale_nc11.reshape(1, Cin).astype(jnp.float32)
    w2d = w_oihw.reshape(Cout, Cin).astype(jnp.float32)
    g2d = gamma.reshape(Cout, 1).astype(jnp.float32)
    b2d = beta.reshape(Cout, 1).astype(jnp.float32)

    out2d = pl.pallas_call(
        _fused_kernel,
        out_shape=jax.ShapeDtypeStruct((Cout, M), jnp.float32),
        in_specs=[pl.BlockSpec(memory_space=pltpu.MemorySpace.VMEM)] * 5,
        out_specs=pl.BlockSpec(memory_space=pltpu.MemorySpace.VMEM),
    )(x2d, s2d, w2d, g2d, b2d)

    # TODO(synk): BatchNorm2d running_mean / running_var buffer updates are not
    # produced (only the train-mode normalized forward output).
    return out2d.reshape(N, Cout, H, W)


def _reference(x_nchw, scale_nc11, w_oihw, gamma, beta):
    """Pure-JAX f32 reference for correctness check."""
    x = x_nchw * scale_nc11
    N, Cin, H, W = x.shape
    Cout = w_oihw.shape[0]
    w2d = w_oihw.reshape(Cout, Cin)
    y = jnp.einsum('nchw,oc->nohw', x, w2d,
                   precision=jax.lax.Precision.HIGHEST)
    mean = jnp.mean(y, axis=(0, 2, 3), keepdims=True)
    var = jnp.mean((y - mean) ** 2, axis=(0, 2, 3), keepdims=True)
    y_hat = (y - mean) / jnp.sqrt(var + EPS)
    return y_hat * gamma.reshape(1, Cout, 1, 1) + beta.reshape(1, Cout, 1, 1)


if __name__ == "__main__":
    key = jax.random.PRNGKey(0)
    k1, k2, k3, k4, k5 = jax.random.split(key, 5)

    N, Cin, H, W, Cout = 1, 768, 14, 14, 192  # shapes implied by the module

    x265 = jax.random.normal(k1, (N, Cin, H, W), dtype=jnp.float32)
    x270 = jax.random.normal(k2, (1, Cin, 1, 1), dtype=jnp.float32)

    # Deterministic synthetic parameters (module __init__ shapes).
    conv_w = jax.random.normal(k3, (Cout, Cin, 1, 1), dtype=jnp.float32) * 0.02
    gamma = 1.0 + 0.1 * jax.random.normal(k4, (Cout,), dtype=jnp.float32)
    beta = 0.1 * jax.random.normal(k5, (Cout,), dtype=jnp.float32)

    out = fused_mul_conv_bn(x265, x270, conv_w, gamma, beta)
    out = jax.block_until_ready(out)

    ref = _reference(x265, x270, conv_w, gamma, beta)
    assert out.shape == (N, Cout, H, W)
    # bf16 MXU operands (f32 accumulation + f32 BN stats): tolerance sized for
    # ~2^-9 relative rounding over K=768 on BN-normalized (unit-scale) outputs.
    assert jnp.allclose(out, ref, atol=2e-2, rtol=2e-2), "mismatch vs reference"

    print("KERNEL_OK")
</pallas_src>

<mosaic_0001>
module attributes {stable_mosaic.version = 11 : i64} {
  func.func @_fused_kernel(%arg0: memref<768x196xf32, #tpu.memory_space<vmem>>, %arg1: memref<1x768xf32, #tpu.memory_space<vmem>>, %arg2: memref<192x768xf32, #tpu.memory_space<vmem>>, %arg3: memref<192x1xf32, #tpu.memory_space<vmem>>, %arg4: memref<192x1xf32, #tpu.memory_space<vmem>>, %arg5: memref<192x196xf32, #tpu.memory_space<vmem>>) attributes {dimension_semantics = [], scalar_prefetch = 0 : i64, scratch_operands = 0 : i64, tpu.core_type = #tpu.core_type<tc>} {
    %c0 = arith.constant 0 : index
    %c0_0 = arith.constant 0 : index
    %0 = vector.load %arg2[%c0, %c0_0] : memref<192x768xf32, #tpu.memory_space<vmem>>, vector<192x768xf32>
    %c0_1 = arith.constant 0 : index
    %c0_2 = arith.constant 0 : index
    %1 = vector.load %arg1[%c0_1, %c0_2] : memref<1x768xf32, #tpu.memory_space<vmem>>, vector<1x768xf32>
    %2 = vector.broadcast %1 : vector<1x768xf32> to vector<192x768xf32>
    %3 = arith.mulf %0, %2 : vector<192x768xf32>
    %4 = arith.truncf %3 : vector<192x768xf32> to vector<192x768xbf16>
    %c0_3 = arith.constant 0 : index
    %c0_4 = arith.constant 0 : index
    %5 = vector.load %arg0[%c0_3, %c0_4] : memref<768x196xf32, #tpu.memory_space<vmem>>, vector<768x196xf32>
    %6 = arith.truncf %5 : vector<768x196xf32> to vector<768x196xbf16>
    %cst = arith.constant dense<0.000000e+00> : vector<192x196xf32>
    %7 = tpu.matmul %4, %6, %cst {dimension_numbers = #tpu.dot_dimension_numbers<[1], [0], [0], [1], [0, 0, 1, 1], [], []>} : vector<192x768xbf16>, vector<768x196xbf16>, vector<192x196xf32> -> vector<192x196xf32>
    %cst_5 = arith.constant dense<0.000000e+00> : vector<192xf32>
    %8 = vector.multi_reduction <add>, %7, %cst_5 [1] : vector<192x196xf32> to vector<192xf32>
    %9 = vector.shape_cast %8 : vector<192xf32> to vector<192x1xf32>
    %cst_6 = arith.constant 0.00510204071 : f32
    %10 = vector.broadcast %cst_6 : f32 to vector<192x1xf32>
    %11 = arith.mulf %9, %10 : vector<192x1xf32>
    %12 = arith.mulf %7, %7 : vector<192x196xf32>
    %cst_7 = arith.constant dense<0.000000e+00> : vector<192xf32>
    %13 = vector.multi_reduction <add>, %12, %cst_7 [1] : vector<192x196xf32> to vector<192xf32>
    %14 = vector.shape_cast %13 : vector<192xf32> to vector<192x1xf32>
    %cst_8 = arith.constant 0.00510204071 : f32
    %15 = vector.broadcast %cst_8 : f32 to vector<192x1xf32>
    %16 = arith.mulf %14, %15 : vector<192x1xf32>
    %17 = arith.mulf %11, %11 : vector<192x1xf32>
    %18 = arith.subf %16, %17 : vector<192x1xf32>
    %cst_9 = arith.constant 1.000000e-03 : f32
    %19 = vector.broadcast %cst_9 : f32 to vector<192x1xf32>
    %20 = arith.addf %18, %19 : vector<192x1xf32>
    %21 = math.rsqrt %20 : vector<192x1xf32>
    %c0_10 = arith.constant 0 : index
    %c0_11 = arith.constant 0 : index
    %22 = vector.load %arg3[%c0_10, %c0_11] : memref<192x1xf32, #tpu.memory_space<vmem>>, vector<192x1xf32>
    %23 = arith.mulf %21, %22 : vector<192x1xf32>
    %24 = vector.broadcast %11 : vector<192x1xf32> to vector<192x196xf32>
    %25 = arith.subf %7, %24 : vector<192x196xf32>
    %26 = vector.broadcast %23 : vector<192x1xf32> to vector<192x196xf32>
    %27 = arith.mulf %25, %26 : vector<192x196xf32>
    %c0_12 = arith.constant 0 : index
    %c0_13 = arith.constant 0 : index
    %28 = vector.load %arg4[%c0_12, %c0_13] : memref<192x1xf32, #tpu.memory_space<vmem>>, vector<192x1xf32>
    %29 = vector.broadcast %28 : vector<192x1xf32> to vector<192x196xf32>
    %30 = arith.addf %27, %29 : vector<192x196xf32>
    %c0_14 = arith.constant 0 : index
    %c0_15 = arith.constant 0 : index
    %31 = vector.load %arg5[%c0_14, %c0_15] : memref<192x196xf32, #tpu.memory_space<vmem>>, vector<192x196xf32>
    tpu.vector_store %arg5[%c0_14, %c0_15], %30 {strides = array<i32>} : memref<192x196xf32, #tpu.memory_space<vmem>>, vector<192x196xf32>,
    return
  }
}

</mosaic_0001>

<llo_original>
// kernel: fused_mul_conv_bn.1
$region0: #{fused_mul_conv_bn.1}
  #allocation0 [shape = 'u32[]', space=smem, size = 0x4, offset = 0x4, fixed_abs, tag = 'smem constant byte address 0x4 - core index']
  #allocation1 [shape = 'u32[144,128]{1,0:T(1,128)}', space=vmem, size = 0x12000, scoped, tag = 'internal scratch']
  %s0 = inlined_call_operand.vmem [shape: f32[768,196], index: 0, kind: input, shape index: {}]
  %s1 = inlined_call_operand.vmem [shape: f32[1,768], index: 1, kind: input, shape index: {}]
  %s2 = inlined_call_operand.vmem [shape: f32[192,768], index: 2, kind: input, shape index: {}]
  %s3 = inlined_call_operand.vmem [shape: f32[192,1], index: 3, kind: input, shape index: {}]
  %s4 = inlined_call_operand.vmem [shape: f32[192,1], index: 4, kind: input, shape index: {}]
  %s5 = inlined_call_operand.vmem [shape: f32[192,196], index: 5, kind: output, shape index: {}]
  %s6 = sld [smem:[#allocation0]]
  $region30: #{fused_mul_conv_bn.1} parent=0
    _
  %s8 = ssub.s32 1, %s6
  %s9 = scalar_select 0, %s8, %s6
  // Predicated region
  $region2: #{fused_mul_conv_bn.1} parent=0 // pred_check
    _
  $region3: #{fused_mul_conv_bn.1} parent=0 // pred_check_branch
    %11 = sbr.rel (0) target = $region5
  $region4: #{fused_mul_conv_bn.1} parent=0 // pred_region
    _
  $region5: #{fused_mul_conv_bn.1} parent=0 // pred_fallthru
    _
  // Predicated region
  $region6: #{fused_mul_conv_bn.1} parent=0 // pred_check
    _
  $region7: #{fused_mul_conv_bn.1} parent=0 // pred_check_branch
    %13 = sbr.rel (0) target = $region9
  $region8: #{fused_mul_conv_bn.1} parent=0 // pred_region
    _
  $region9: #{fused_mul_conv_bn.1} parent=0 // pred_fallthru
    _
  // Predicated region
  $region10: #{fused_mul_conv_bn.1} parent=0 // pred_check
    _
  $region11: #{fused_mul_conv_bn.1} parent=0 // pred_check_branch
    %15 = sbr.rel (0) target = $region13
  $region12: #{fused_mul_conv_bn.1} parent=0 // pred_region
    _
  $region13: #{fused_mul_conv_bn.1} parent=0 // pred_fallthru
    _
  // Predicated region
  $region14: #{fused_mul_conv_bn.1} parent=0 // pred_check
    _
  $region15: #{fused_mul_conv_bn.1} parent=0 // pred_check_branch
    %17 = sbr.rel (0) target = $region17
  $region16: #{fused_mul_conv_bn.1} parent=0 // pred_region
    _
  $region17: #{fused_mul_conv_bn.1} parent=0 // pred_fallthru
    _
  // Predicated region
  $region18: #{fused_mul_conv_bn.1} parent=0 // pred_check
    _
  $region19: #{fused_mul_conv_bn.1} parent=0 // pred_check_branch
    %19 = sbr.rel (0) target = $region21
  $region20: #{fused_mul_conv_bn.1} parent=0 // pred_region
    _
  $region21: #{fused_mul_conv_bn.1} parent=0 // pred_fallthru
    _
  %v20 = vld [vmem:[%s2] sm:$0xff]
  %v21 = vld [vmem:[%s2 + $0x8] sm:$0xff]
  %v22 = vld [vmem:[%s2 + $0x10] sm:$0xff]
  %v23 = vld [vmem:[%s2 + $0x18] sm:$0xff]
  %v24 = vld [vmem:[%s2 + $0x20] sm:$0xff]
  %v25 = vld [vmem:[%s2 + $0x28] sm:$0xff]
  %v26 = vld [vmem:[%s2 + $0x30] sm:$0xff]
  %v27 = vld [vmem:[%s2 + $0x38] sm:$0xff]
  %v28 = vld [vmem:[%s2 + $0x40] sm:$0xff]
  %v29 = vld [vmem:[%s2 + $0x48] sm:$0xff]
  %v30 = vld [vmem:[%s2 + $0x50] sm:$0xff]
  %v31 = vld [vmem:[%s2 + $0x58] sm:$0xff]
  %v32 = vld [vmem:[%s2 + $0x60] sm:$0xff]
  %v33 = vld [vmem:[%s2 + $0x68] sm:$0xff]
  %v34 = vld [vmem:[%s2 + $0x70] sm:$0xff]
  %v35 = vld [vmem:[%s2 + $0x78] sm:$0xff]
  %v36 = vld [vmem:[%s2 + $0x80] sm:$0xff]
  %v37 = vld [vmem:[%s2 + $0x88] sm:$0xff]
  %v38 = vld [vmem:[%s2 + $0x90] sm:$0xff]
  %v39 = vld [vmem:[%s2 + $0x98] sm:$0xff]
  %v40 = vld [vmem:[%s2 + $0xa0] sm:$0xff]
  %v41 = vld [vmem:[%s2 + $0xa8] sm:$0xff]
  %v42 = vld [vmem:[%s2 + $0xb0] sm:$0xff]
  %v43 = vld [vmem:[%s2 + $0xb8] sm:$0xff]
  %v44 = vld [vmem:[%s2 + $0xc0] sm:$0xff]
  %v45 = vld [vmem:[%s2 + $0xc8] sm:$0xff]
  %v46 = vld [vmem:[%s2 + $0xd0] sm:$0xff]
  %v47 = vld [vmem:[%s2 + $0xd8] sm:$0xff]
  %v48 = vld [vmem:[%s2 + $0xe0] sm:$0xff]
  %v49 = vld [vmem:[%s2 + $0xe8] sm:$0xff]
  %v50 = vld [vmem:[%s2 + $0xf0] sm:$0xff]
  %v51 = vld [vmem:[%s2 + $0xf8] sm:$0xff]
  %v52 = vld [vmem:[%s2 + $0x100] sm:$0xff]
  %v53 = vld [vmem:[%s2 + $0x108] sm:$0xff]
  %v54 = vld [vmem:[%s2 + $0x110] sm:$0xff]
  %v55 = vld [vmem:[%s2 + $0x118] sm:$0xff]
  %v56 = vld [vmem:[%s2 + $0x120] sm:$0xff]
  %v57 = vld [vmem:[%s2 + $0x128] sm:$0xff]
  %v58 = vld [vmem:[%s2 + $0x130] sm:$0xff]
  %v59 = vld [vmem:[%s2 + $0x138] sm:$0xff]
  %v60 = vld [vmem:[%s2 + $0x140] sm:$0xff]
  %v61 = vld [vmem:[%s2 + $0x148] sm:$0xff]
  %v62 = vld [vmem:[%s2 + $0x150] sm:$0xff]
  %v63 = vld [vmem:[%s2 + $0x158] sm:$0xff]
  %v64 = vld [vmem:[%s2 + $0x160] sm:$0xff]
  %v65 = vld [vmem:[%s2 + $0x168] sm:$0xff]
  %v66 = vld [vmem:[%s2 + $0x170] sm:$0xff]
  %v67 = vld [vmem:[%s2 + $0x178] sm:$0xff]
  %v68 = vld [vmem:[%s2 + $0x180] sm:$0xff]
  %v69 = vld [vmem:[%s2 + $0x188] sm:$0xff]
  %v70 = vld [vmem:[%s2 + $0x190] sm:$0xff]
  %v71 = vld [vmem:[%s2 + $0x198] sm:$0xff]
  %v72 = vld [vmem:[%s2 + $0x1a0] sm:$0xff]
  %v73 = vld [vmem:[%s2 + $0x1a8] sm:$0xff]
  %v74 = vld [vmem:[%s2 + $0x1b0] sm:$0xff]
  %v75 = vld [vmem:[%s2 + $0x1b8] sm:$0xff]
  %v76 = vld [vmem:[%s2 + $0x1c0] sm:$0xff]
  %v77 = vld [vmem:[%s2 + $0x1c8] sm:$0xff]
  %v78 = vld [vmem:[%s2 + $0x1d0] sm:$0xff]
  %v79 = vld [vmem:[%s2 + $0x1d8] sm:$0xff]
  %v80 = vld [vmem:[%s2 + $0x1e0] sm:$0xff]
  %v81 = vld [vmem:[%s2 + $0x1e8] sm:$0xff]
  %v82 = vld [vmem:[%s2 + $0x1f0] sm:$0xff]
  %v83 = vld [vmem:[%s2 + $0x1f8] sm:$0xff]
  %v84 = vld [vmem:[%s2 + $0x200] sm:$0xff]
  %v85 = vld [vmem:[%s2 + $0x208] sm:$0xff]
  %v86 = vld [vmem:[%s2 + $0x210] sm:$0xff]
  %v87 = vld [vmem:[%s2 + $0x218] sm:$0xff]
  %v88 = vld [vmem:[%s2 + $0x220] sm:$0xff]
  %v89 = vld [vmem:[%s2 + $0x228] sm:$0xff]
  %v90 = vld [vmem:[%s2 + $0x230] sm:$0xff]
  %v91 = vld [vmem:[%s2 + $0x238] sm:$0xff]
  %v92 = vld [vmem:[%s2 + $0x240] sm:$0xff]
  %v93 = vld [vmem:[%s2 + $0x248] sm:$0xff]
  %v94 = vld [vmem:[%s2 + $0x250] sm:$0xff]
  %v95 = vld [vmem:[%s2 + $0x258] sm:$0xff]
  %v96 = vld [vmem:[%s2 + $0x260] sm:$0xff]
  %v97 = vld [vmem:[%s2 + $0x268] sm:$0xff]
  %v98 = vld [vmem:[%s2 + $0x270] sm:$0xff]
  %v99 = vld [vmem:[%s2 + $0x278] sm:$0xff]
  %v100 = vld [vmem:[%s2 + $0x280] sm:$0xff]
  %v101 = vld [vmem:[%s2 + $0x288] sm:$0xff]
  %v102 = vld [vmem:[%s2 + $0x290] sm:$0xff]
  %v103 = vld [vmem:[%s2 + $0x298] sm:$0xff]
  %v104 = vld [vmem:[%s2 + $0x2a0] sm:$0xff]
  %v105 = vld [vmem:[%s2 + $0x2a8] sm:$0xff]
  %v106 = vld [vmem:[%s2 + $0x2b0] sm:$0xff]
  %v107 = vld [vmem:[%s2 + $0x2b8] sm:$0xff]
  %v108 = vld [vmem:[%s2 + $0x2c0] sm:$0xff]
  %v109 = vld [vmem:[%s2 + $0x2c8] sm:$0xff]
  %v110 = vld [vmem:[%s2 + $0x2d0] sm:$0xff]
  %v111 = vld [vmem:[%s2 + $0x2d8] sm:$0xff]
  %v112 = vld [vmem:[%s2 + $0x2e0] sm:$0xff]
  %v113 = vld [vmem:[%s2 + $0x2e8] sm:$0xff]
  %v114 = vld [vmem:[%s2 + $0x2f0] sm:$0xff]
  %v115 = vld [vmem:[%s2 + $0x2f8] sm:$0xff]
  %v116 = vld [vmem:[%s2 + $0x300] sm:$0xff]
  %v117 = vld [vmem:[%s2 + $0x308] sm:$0xff]
  %v118 = vld [vmem:[%s2 + $0x310] sm:$0xff]
  %v119 = vld [vmem:[%s2 + $0x318] sm:$0xff]
  %v120 = vld [vmem:[%s2 + $0x320] sm:$0xff]
  %v121 = vld [vmem:[%s2 + $0x328] sm:$0xff]
  %v122 = vld [vmem:[%s2 + $0x330] sm:$0xff]
  %v123 = vld [vmem:[%s2 + $0x338] sm:$0xff]
  %v124 = vld [vmem:[%s2 + $0x340] sm:$0xff]
  %v125 = vld [vmem:[%s2 + $0x348] sm:$0xff]
  %v126 = vld [vmem:[%s2 + $0x350] sm:$0xff]
  %v127 = vld [vmem:[%s2 + $0x358] sm:$0xff]
  %v128 = vld [vmem:[%s2 + $0x360] sm:$0xff]
  %v129 = vld [vmem:[%s2 + $0x368] sm:$0xff]
  %v130 = vld [vmem:[%s2 + $0x370] sm:$0xff]
  %v131 = vld [vmem:[%s2 + $0x378] sm:$0xff]
  %v132 = vld [vmem:[%s2 + $0x380] sm:$0xff]
  %v133 = vld [vmem:[%s2 + $0x388] sm:$0xff]
  %v134 = vld [vmem:[%s2 + $0x390] sm:$0xff]
  %v135 = vld [vmem:[%s2 + $0x398] sm:$0xff]
  %v136 = vld [vmem:[%s2 + $0x3a0] sm:$0xff]
  %v137 = vld [vmem:[%s2 + $0x3a8] sm:$0xff]
  %v138 = vld [vmem:[%s2 + $0x3b0] sm:$0xff]
  %v139 = vld [vmem:[%s2 + $0x3b8] sm:$0xff]
  %v140 = vld [vmem:[%s2 + $0x3c0] sm:$0xff]
  %v141 = vld [vmem:[%s2 + $0x3c8] sm:$0xff]
  %v142 = vld [vmem:[%s2 + $0x3d0] sm:$0xff]
  %v143 = vld [vmem:[%s2 + $0x3d8] sm:$0xff]
  %v144 = vld [vmem:[%s2 + $0x3e0] sm:$0xff]
  %v145 = vld [vmem:[%s2 + $0x3e8] sm:$0xff]
  %v146 = vld [vmem:[%s2 + $0x3f0] sm:$0xff]
  %v147 = vld [vmem:[%s2 + $0x3f8] sm:$0xff]
  %v148 = vld [vmem:[%s2 + $0x400] sm:$0xff]
  %v149 = vld [vmem:[%s2 + $0x408] sm:$0xff]
  %v150 = vld [vmem:[%s2 + $0x410] sm:$0xff]
  %v151 = vld [vmem:[%s2 + $0x418] sm:$0xff]
  %v152 = vld [vmem:[%s2 + $0x420] sm:$0xff]
  %v153 = vld [vmem:[%s2 + $0x428] sm:$0xff]
  %v154 = vld [vmem:[%s2 + $0x430] sm:$0xff]
  %v155 = vld [vmem:[%s2 + $0x438] sm:$0xff]
  %v156 = vld [vmem:[%s2 + $0x440] sm:$0xff]
  %v157 = vld [vmem:[%s2 + $0x448] sm:$0xff]
  %v158 = vld [vmem:[%s2 + $0x450] sm:$0xff]
  %v159 = vld [vmem:[%s2 + $0x458] sm:$0xff]
  %v160 = vld [vmem:[%s2 + $0x460] sm:$0xff]
  %v161 = vld [vmem:[%s2 + $0x468] sm:$0xff]
  %v162 = vld [vmem:[%s2 + $0x470] sm:$0xff]
  %v163 = vld [vmem:[%s2 + $0x478] sm:$0xff]
  %v164 = vld [vmem:[%s1] sm:$0x3f]
  %v166 = vlaneseq
  %v167 = vshrl.u32 %v166, 7
  %v168 = vsub.s32 0, %v167
  %v169 = vrot.slane %v164, %v168
  %v170 = vlaneseq
  %v171 = vshrl.u32 %v170, 7
  %v172 = vsub.s32 1, %v171
  %v173 = vrot.slane %v164, %v172
  %v174 = vlaneseq
  %v175 = vshrl.u32 %v174, 7
  %v176 = vsub.s32 2, %v175
  %v177 = vrot.slane %v164, %v176
  %v178 = vlaneseq
  %v179 = vshrl.u32 %v178, 7
  %v180 = vsub.s32 3, %v179
  %v181 = vrot.slane %v164, %v180
  %v182 = vlaneseq
  %v183 = vshrl.u32 %v182, 7
  %v184 = vsub.s32 4, %v183
  %v185 = vrot.slane %v164, %v184
  %v186 = vlaneseq
  %v187 = vshrl.u32 %v186, 7
  %v188 = vsub.s32 5, %v187
  %v189 = vrot.slane %v164, %v188
  %v196 = vmul.f32 %v20, %v169
  %v197 = vmul.f32 %v21, %v173
  %v198 = vmul.f32 %v22, %v177
  %v199 = vmul.f32 %v23, %v181
  %v200 = vmul.f32 %v24, %v185
  %v201 = vmul.f32 %v25, %v189
  %v202 = vmul.f32 %v26, %v169
  %v203 = vmul.f32 %v27, %v173
  %v204 = vmul.f32 %v28, %v177
  %v205 = vmul.f32 %v29, %v181
  %v206 = vmul.f32 %v30, %v185
  %v207 = vmul.f32 %v31, %v189
  %v208 = vmul.f32 %v32, %v169
  %v209 = vmul.f32 %v33, %v173
  %v210 = vmul.f32 %v34, %v177
  %v211 = vmul.f32 %v35, %v181
  %v212 = vmul.f32 %v36, %v185
  %v213 = vmul.f32 %v37, %v189
  %v214 = vmul.f32 %v38, %v169
  %v215 = vmul.f32 %v39, %v173
  %v216 = vmul.f32 %v40, %v177
  %v217 = vmul.f32 %v41, %v181
  %v218 = vmul.f32 %v42, %v185
  %v219 = vmul.f32 %v43, %v189
  %v220 = vmul.f32 %v44, %v169
  %v221 = vmul.f32 %v45, %v173
  %v222 = vmul.f32 %v46, %v177
  %v223 = vmul.f32 %v47, %v181
  %v224 = vmul.f32 %v48, %v185
  %v225 = vmul.f32 %v49, %v189
  %v226 = vmul.f32 %v50, %v169
  %v227 = vmul.f32 %v51, %v173
  %v228 = vmul.f32 %v52, %v177
  %v229 = vmul.f32 %v53, %v181
  %v230 = vmul.f32 %v54, %v185
  %v231 = vmul.f32 %v55, %v189
  %v232 = vmul.f32 %v56, %v169
  %v233 = vmul.f32 %v57, %v173
  %v234 = vmul.f32 %v58, %v177
  %v235 = vmul.f32 %v59, %v181
  %v236 = vmul.f32 %v60, %v185
  %v237 = vmul.f32 %v61, %v189
  %v238 = vmul.f32 %v62, %v169
  %v239 = vmul.f32 %v63, %v173
  %v240 = vmul.f32 %v64, %v177
  %v241 = vmul.f32 %v65, %v181
  %v242 = vmul.f32 %v66, %v185
  %v243 = vmul.f32 %v67, %v189
  %v244 = vmul.f32 %v68, %v169
  %v245 = vmul.f32 %v69, %v173
  %v246 = vmul.f32 %v70, %v177
  %v247 = vmul.f32 %v71, %v181
  %v248 = vmul.f32 %v72, %v185
  %v249 = vmul.f32 %v73, %v189
  %v250 = vmul.f32 %v74, %v169
  %v251 = vmul.f32 %v75, %v173
  %v252 = vmul.f32 %v76, %v177
  %v253 = vmul.f32 %v77, %v181
  %v254 = vmul.f32 %v78, %v185
  %v255 = vmul.f32 %v79, %v189
  %v256 = vmul.f32 %v80, %v169
  %v257 = vmul.f32 %v81, %v173
  %v258 = vmul.f32 %v82, %v177
  %v259 = vmul.f32 %v83, %v181
  %v260 = vmul.f32 %v84, %v185
  %v261 = vmul.f32 %v85, %v189
  %v262 = vmul.f32 %v86, %v169
  %v263 = vmul.f32 %v87, %v173
  %v264 = vmul.f32 %v88, %v177
  %v265 = vmul.f32 %v89, %v181
  %v266 = vmul.f32 %v90, %v185
  %v267 = vmul.f32 %v91, %v189
  %v268 = vmul.f32 %v92, %v169
  %v269 = vmul.f32 %v93, %v173
  %v270 = vmul.f32 %v94, %v177
  %v271 = vmul.f32 %v95, %v181
  %v272 = vmul.f32 %v96, %v185
  %v273 = vmul.f32 %v97, %v189
  %v274 = vmul.f32 %v98, %v169
  %v275 = vmul.f32 %v99, %v173
  %v276 = vmul.f32 %v100, %v177
  %v277 = vmul.f32 %v101, %v181
  %v278 = vmul.f32 %v102, %v185
  %v279 = vmul.f32 %v103, %v189
  %v280 = vmul.f32 %v104, %v169
  %v281 = vmul.f32 %v105, %v173
  %v282 = vmul.f32 %v106, %v177
  %v283 = vmul.f32 %v107, %v181
  %v284 = vmul.f32 %v108, %v185
  %v285 = vmul.f32 %v109, %v189
  %v286 = vmul.f32 %v110, %v169
  %v287 = vmul.f32 %v111, %v173
  %v288 = vmul.f32 %v112, %v177
  %v289 = vmul.f32 %v113, %v181
  %v290 = vmul.f32 %v114, %v185
  %v291 = vmul.f32 %v115, %v189
  %v292 = vmul.f32 %v116, %v169
  %v293 = vmul.f32 %v117, %v173
  %v294 = vmul.f32 %v118, %v177
  %v295 = vmul.f32 %v119, %v181
  %v296 = vmul.f32 %v120, %v185
  %v297 = vmul.f32 %v121, %v189
  %v298 = vmul.f32 %v122, %v169
  %v299 = vmul.f32 %v123, %v173
  %v300 = vmul.f32 %v124, %v177
  %v301 = vmul.f32 %v125, %v181
  %v302 = vmul.f32 %v126, %v185
  %v303 = vmul.f32 %v127, %v189
  %v304 = vmul.f32 %v128, %v169
  %v305 = vmul.f32 %v129, %v173
  %v306 = vmul.f32 %v130, %v177
  %v307 = vmul.f32 %v131, %v181
  %v308 = vmul.f32 %v132, %v185
  %v309 = vmul.f32 %v133, %v189
  %v310 = vmul.f32 %v134, %v169
  %v311 = vmul.f32 %v135, %v173
  %v312 = vmul.f32 %v136, %v177
  %v313 = vmul.f32 %v137, %v181
  %v314 = vmul.f32 %v138, %v185
  %v315 = vmul.f32 %v139, %v189
  %v316 = vmul.f32 %v140, %v169
  %v317 = vmul.f32 %v141, %v173
  %v318 = vmul.f32 %v142, %v177
  %v319 = vmul.f32 %v143, %v181
  %v320 = vmul.f32 %v144, %v185
  %v321 = vmul.f32 %v145, %v189
  %v322 = vmul.f32 %v146, %v169
  %v323 = vmul.f32 %v147, %v173
  %v324 = vmul.f32 %v148, %v177
  %v325 = vmul.f32 %v149, %v181
  %v326 = vmul.f32 %v150, %v185
  %v327 = vmul.f32 %v151, %v189
  %v328 = vmul.f32 %v152, %v169
  %v329 = vmul.f32 %v153, %v173
  %v330 = vmul.f32 %v154, %v177
  %v331 = vmul.f32 %v155, %v181
  %v332 = vmul.f32 %v156, %v185
  %v333 = vmul.f32 %v157, %v189
  %v334 = vmul.f32 %v158, %v169
  %v335 = vmul.f32 %v159, %v173
  %v336 = vmul.f32 %v160, %v177
  %v337 = vmul.f32 %v161, %v181
  %v338 = vmul.f32 %v162, %v185
  %v339 = vmul.f32 %v163, %v189
  %v340 = vpack.c.bf16 %v202, %v196
  %v341 = vpack.c.bf16 %v203, %v197
  %v342 = vpack.c.bf16 %v204, %v198
  %v343 = vpack.c.bf16 %v205, %v199
  %v344 = vpack.c.bf16 %v206, %v200
  %v345 = vpack.c.bf16 %v207, %v201
  %v346 = vpack.c.bf16 %v214, %v208
  %v347 = vpack.c.bf16 %v215, %v209
  %v348 = vpack.c.bf16 %v216, %v210
  %v349 = vpack.c.bf16 %v217, %v211
  %v350 = vpack.c.bf16 %v218, %v212
  %v351 = vpack.c.bf16 %v219, %v213
  %v352 = vpack.c.bf16 %v226, %v220
  %v353 = vpack.c.bf16 %v227, %v221
  %v354 = vpack.c.bf16 %v228, %v222
  %v355 = vpack.c.bf16 %v229, %v223
  %v356 = vpack.c.bf16 %v230, %v224
  %v357 = vpack.c.bf16 %v231, %v225
  %v358 = vpack.c.bf16 %v238, %v232
  %v359 = vpack.c.bf16 %v239, %v233
  %v360 = vpack.c.bf16 %v240, %v234
  %v361 = vpack.c.bf16 %v241, %v235
  %v362 = vpack.c.bf16 %v242, %v236
  %v363 = vpack.c.bf16 %v243, %v237
  %v364 = vpack.c.bf16 %v250, %v244
  %v365 = vpack.c.bf16 %v251, %v245
  %v366 = vpack.c.bf16 %v252, %v246
  %v367 = vpack.c.bf16 %v253, %v247
  %v368 = vpack.c.bf16 %v254, %v248
  %v369 = vpack.c.bf16 %v255, %v249
  %v370 = vpack.c.bf16 %v262, %v256
  %v371 = vpack.c.bf16 %v263, %v257
  %v372 = vpack.c.bf16 %v264, %v258
  %v373 = vpack.c.bf16 %v265, %v259
  %v374 = vpack.c.bf16 %v266, %v260
  %v375 = vpack.c.bf16 %v267, %v261
  %v376 = vpack.c.bf16 %v274, %v268
  %v377 = vpack.c.bf16 %v275, %v269
  %v378 = vpack.c.bf16 %v276, %v270
  %v379 = vpack.c.bf16 %v277, %v271
  %v380 = vpack.c.bf16 %v278, %v272
  %v381 = vpack.c.bf16 %v279, %v273
  %v382 = vpack.c.bf16 %v286, %v280
  %v383 = vpack.c.bf16 %v287, %v281
  %v384 = vpack.c.bf16 %v288, %v282
  %v385 = vpack.c.bf16 %v289, %v283
  %v386 = vpack.c.bf16 %v290, %v284
  %v387 = vpack.c.bf16 %v291, %v285
  %v388 = vpack.c.bf16 %v298, %v292
  %v389 = vpack.c.bf16 %v299, %v293
  %v390 = vpack.c.bf16 %v300, %v294
  %v391 = vpack.c.bf16 %v301, %v295
  %v392 = vpack.c.bf16 %v302, %v296
  %v393 = vpack.c.bf16 %v303, %v297
  %v394 = vpack.c.bf16 %v310, %v304
  %v395 = vpack.c.bf16 %v311, %v305
  %v396 = vpack.c.bf16 %v312, %v306
  %v397 = vpack.c.bf16 %v313, %v307
  %v398 = vpack.c.bf16 %v314, %v308
  %v399 = vpack.c.bf16 %v315, %v309
  %v400 = vpack.c.bf16 %v322, %v316
  %v401 = vpack.c.bf16 %v323, %v317
  %v402 = vpack.c.bf16 %v324, %v318
  %v403 = vpack.c.bf16 %v325, %v319
  %v404 = vpack.c.bf16 %v326, %v320
  %v405 = vpack.c.bf16 %v327, %v321
  %v406 = vpack.c.bf16 %v334, %v328
  %v407 = vpack.c.bf16 %v335, %v329
  %v408 = vpack.c.bf16 %v336, %v330
  %v409 = vpack.c.bf16 %v337, %v331
  %v410 = vpack.c.bf16 %v338, %v332
  %v411 = vpack.c.bf16 %v339, %v333
  %v412 = vld [vmem:[%s0] sm:$0xff]
  %v413 = vld [vmem:[%s0 + $0x8] sm:$0xff]
  %v414 = vld [vmem:[%s0 + $0x10] sm:$0xff]
  %v415 = vld [vmem:[%s0 + $0x18] sm:$0xff]
  %v416 = vld [vmem:[%s0 + $0x20] sm:$0xff]
  %v417 = vld [vmem:[%s0 + $0x28] sm:$0xff]
  %v418 = vld [vmem:[%s0 + $0x30] sm:$0xff]
  %v419 = vld [vmem:[%s0 + $0x38] sm:$0xff]
  %v420 = vld [vmem:[%s0 + $0x40] sm:$0xff]
  %v421 = vld [vmem:[%s0 + $0x48] sm:$0xff]
  %v422 = vld [vmem:[%s0 + $0x50] sm:$0xff]
  %v423 = vld [vmem:[%s0 + $0x58] sm:$0xff]
  %v424 = vld [vmem:[%s0 + $0x60] sm:$0xff]
  %v425 = vld [vmem:[%s0 + $0x68] sm:$0xff]
  %v426 = vld [vmem:[%s0 + $0x70] sm:$0xff]
  %v427 = vld [vmem:[%s0 + $0x78] sm:$0xff]
  %v428 = vld [vmem:[%s0 + $0x80] sm:$0xff]
  %v429 = vld [vmem:[%s0 + $0x88] sm:$0xff]
  %v430 = vld [vmem:[%s0 + $0x90] sm:$0xff]
  %v431 = vld [vmem:[%s0 + $0x98] sm:$0xff]
  %v432 = vld [vmem:[%s0 + $0xa0] sm:$0xff]
  %v433 = vld [vmem:[%s0 + $0xa8] sm:$0xff]
  %v434 = vld [vmem:[%s0 + $0xb0] sm:$0xff]
  %v435 = vld [vmem:[%s0 + $0xb8] sm:$0xff]
  %v436 = vld [vmem:[%s0 + $0xc0] sm:$0xff]
  %v437 = vld [vmem:[%s0 + $0xc8] sm:$0xff]
  %v438 = vld [vmem:[%s0 + $0xd0] sm:$0xff]
  %v439 = vld [vmem:[%s0 + $0xd8] sm:$0xff]
  %v440 = vld [vmem:[%s0 + $0xe0] sm:$0xff]
  %v441 = vld [vmem:[%s0 + $0xe8] sm:$0xff]
  %v442 = vld [vmem:[%s0 + $0xf0] sm:$0xff]
  %v443 = vld [vmem:[%s0 + $0xf8] sm:$0xff]
  %v444 = vld [vmem:[%s0 + $0x100] sm:$0xff]
  %v445 = vld [vmem:[%s0 + $0x108] sm:$0xff]
  %v446 = vld [vmem:[%s0 + $0x110] sm:$0xff]
  %v447 = vld [vmem:[%s0 + $0x118] sm:$0xff]
  %v448 = vld [vmem:[%s0 + $0x120] sm:$0xff]
  %v449 = vld [vmem:[%s0 + $0x128] sm:$0xff]
  %v450 = vld [vmem:[%s0 + $0x130] sm:$0xff]
  %v451 = vld [vmem:[%s0 + $0x138] sm:$0xff]
  %v452 = vld [vmem:[%s0 + $0x140] sm:$0xff]
  %v453 = vld [vmem:[%s0 + $0x148] sm:$0xff]
  %v454 = vld [vmem:[%s0 + $0x150] sm:$0xff]
  %v455 = vld [vmem:[%s0 + $0x158] sm:$0xff]
  %v456 = vld [vmem:[%s0 + $0x160] sm:$0xff]
  %v457 = vld [vmem:[%s0 + $0x168] sm:$0xff]
  %v458 = vld [vmem:[%s0 + $0x170] sm:$0xff]
  %v459 = vld [vmem:[%s0 + $0x178] sm:$0xff]
  %v460 = vld [vmem:[%s0 + $0x180] sm:$0xff]
  %v461 = vld [vmem:[%s0 + $0x188] sm:$0xff]
  %v462 = vld [vmem:[%s0 + $0x190] sm:$0xff]
  %v463 = vld [vmem:[%s0 + $0x198] sm:$0xff]
  %v464 = vld [vmem:[%s0 + $0x1a0] sm:$0xff]
  %v465 = vld [vmem:[%s0 + $0x1a8] sm:$0xff]
  %v466 = vld [vmem:[%s0 + $0x1b0] sm:$0xff]
  %v467 = vld [vmem:[%s0 + $0x1b8] sm:$0xff]
  %v468 = vld [vmem:[%s0 + $0x1c0] sm:$0xff]
  %v469 = vld [vmem:[%s0 + $0x1c8] sm:$0xff]
  %v470 = vld [vmem:[%s0 + $0x1d0] sm:$0xff]
  %v471 = vld [vmem:[%s0 + $0x1d8] sm:$0xff]
  %v472 = vld [vmem:[%s0 + $0x1e0] sm:$0xff]
  %v473 = vld [vmem:[%s0 + $0x1e8] sm:$0xff]
  %v474 = vld [vmem:[%s0 + $0x1f0] sm:$0xff]
  %v475 = vld [vmem:[%s0 + $0x1f8] sm:$0xff]
  %v476 = vld [vmem:[%s0 + $0x200] sm:$0xff]
  %v477 = vld [vmem:[%s0 + $0x208] sm:$0xff]
  %v478 = vld [vmem:[%s0 + $0x210] sm:$0xff]
  %v479 = vld [vmem:[%s0 + $0x218] sm:$0xff]
  %v480 = vld [vmem:[%s0 + $0x220] sm:$0xff]
  %v481 = vld [vmem:[%s0 + $0x228] sm:$0xff]
  %v482 = vld [vmem:[%s0 + $0x230] sm:$0xff]
  %v483 = vld [vmem:[%s0 + $0x238] sm:$0xff]
  %v484 = vld [vmem:[%s0 + $0x240] sm:$0xff]
  %v485 = vld [vmem:[%s0 + $0x248] sm:$0xff]
  %v486 = vld [vmem:[%s0 + $0x250] sm:$0xff]
  %v487 = vld [vmem:[%s0 + $0x258] sm:$0xff]
  %v488 = vld [vmem:[%s0 + $0x260] sm:$0xff]
  %v489 = vld [vmem:[%s0 + $0x268] sm:$0xff]
  %v490 = vld [vmem:[%s0 + $0x270] sm:$0xff]
  %v491 = vld [vmem:[%s0 + $0x278] sm:$0xff]
  %v492 = vld [vmem:[%s0 + $0x280] sm:$0xff]
  %v493 = vld [vmem:[%s0 + $0x288] sm:$0xff]
  %v494 = vld [vmem:[%s0 + $0x290] sm:$0xff]
  %v495 = vld [vmem:[%s0 + $0x298] sm:$0xff]
  %v496 = vld [vmem:[%s0 + $0x2a0] sm:$0xff]
  %v497 = vld [vmem:[%s0 + $0x2a8] sm:$0xff]
  %v498 = vld [vmem:[%s0 + $0x2b0] sm:$0xff]
  %v499 = vld [vmem:[%s0 + $0x2b8] sm:$0xff]
  %v500 = vld [vmem:[%s0 + $0x2c0] sm:$0xff]
  %v501 = vld [vmem:[%s0 + $0x2c8] sm:$0xff]
  %v502 = vld [vmem:[%s0 + $0x2d0] sm:$0xff]
  %v503 = vld [vmem:[%s0 + $0x2d8] sm:$0xff]
  %v504 = vld [vmem:[%s0 + $0x2e0] sm:$0xff]
  %v505 = vld [vmem:[%s0 + $0x2e8] sm:$0xff]
  %v506 = vld [vmem:[%s0 + $0x2f0] sm:$0xff]
  %v507 = vld [vmem:[%s0 + $0x2f8] sm:$0xff]
  %v508 = vld [vmem:[%s0 + $0x300] sm:$0xff]
  %v509 = vld [vmem:[%s0 + $0x308] sm:$0xff]
  %v510 = vld [vmem:[%s0 + $0x310] sm:$0xff]
  %v511 = vld [vmem:[%s0 + $0x318] sm:$0xff]
  %v512 = vld [vmem:[%s0 + $0x320] sm:$0xff]
  %v513 = vld [vmem:[%s0 + $0x328] sm:$0xff]
  %v514 = vld [vmem:[%s0 + $0x330] sm:$0xff]
  %v515 = vld [vmem:[%s0 + $0x338] sm:$0xff]
  %v516 = vld [vmem:[%s0 + $0x340] sm:$0xff]
  %v517 = vld [vmem:[%s0 + $0x348] sm:$0xff]
  %v518 = vld [vmem:[%s0 + $0x350] sm:$0xff]
  %v519 = vld [vmem:[%s0 + $0x358] sm:$0xff]
  %v520 = vld [vmem:[%s0 + $0x360] sm:$0xff]
  %v521 = vld [vmem:[%s0 + $0x368] sm:$0xff]
  %v522 = vld [vmem:[%s0 + $0x370] sm:$0xff]
  %v523 = vld [vmem:[%s0 + $0x378] sm:$0xff]
  %v524 = vld [vmem:[%s0 + $0x380] sm:$0xff]
  %v525 = vld [vmem:[%s0 + $0x388] sm:$0xff]
  %v526 = vld [vmem:[%s0 + $0x390] sm:$0xff]
  %v527 = vld [vmem:[%s0 + $0x398] sm:$0xff]
  %v528 = vld [vmem:[%s0 + $0x3a0] sm:$0xff]
  %v529 = vld [vmem:[%s0 + $0x3a8] sm:$0xff]
  %v530 = vld [vmem:[%s0 + $0x3b0] sm:$0xff]
  %v531 = vld [vmem:[%s0 + $0x3b8] sm:$0xff]
  %v532 = vld [vmem:[%s0 + $0x3c0] sm:$0xff]
  %v533 = vld [vmem:[%s0 + $0x3c8] sm:$0xff]
  %v534 = vld [vmem:[%s0 + $0x3d0] sm:$0xff]
  %v535 = vld [vmem:[%s0 + $0x3d8] sm:$0xff]
  %v536 = vld [vmem:[%s0 + $0x3e0] sm:$0xff]
  %v537 = vld [vmem:[%s0 + $0x3e8] sm:$0xff]
  %v538 = vld [vmem:[%s0 + $0x3f0] sm:$0xff]
  %v539 = vld [vmem:[%s0 + $0x3f8] sm:$0xff]
  %v540 = vld [vmem:[%s0 + $0x400] sm:$0xff]
  %v541 = vld [vmem:[%s0 + $0x408] sm:$0xff]
  %v542 = vld [vmem:[%s0 + $0x410] sm:$0xff]
  %v543 = vld [vmem:[%s0 + $0x418] sm:$0xff]
  %v544 = vld [vmem:[%s0 + $0x420] sm:$0xff]
  %v545 = vld [vmem:[%s0 + $0x428] sm:$0xff]
  %v546 = vld [vmem:[%s0 + $0x430] sm:$0xff]
  %v547 = vld [vmem:[%s0 + $0x438] sm:$0xff]
  %v548 = vld [vmem:[%s0 + $0x440] sm:$0xff]
  %v549 = vld [vmem:[%s0 + $0x448] sm:$0xff]
  %v550 = vld [vmem:[%s0 + $0x450] sm:$0xff]
  %v551 = vld [vmem:[%s0 + $0x458] sm:$0xff]
  %v552 = vld [vmem:[%s0 + $0x460] sm:$0xff]
  %v553 = vld [vmem:[%s0 + $0x468] sm:$0xff]
  %v554 = vld [vmem:[%s0 + $0x470] sm:$0xff]
  %v555 = vld [vmem:[%s0 + $0x478] sm:$0xff]
  %v556 = vld [vmem:[%s0 + $0x480] sm:$0xff]
  %v557 = vld [vmem:[%s0 + $0x488] sm:$0xff]
  %v558 = vld [vmem:[%s0 + $0x490] sm:$0xff]
  %v559 = vld [vmem:[%s0 + $0x498] sm:$0xff]
  %v560 = vld [vmem:[%s0 + $0x4a0] sm:$0xff]
  %v561 = vld [vmem:[%s0 + $0x4a8] sm:$0xff]
  %v562 = vld [vmem:[%s0 + $0x4b0] sm:$0xff]
  %v563 = vld [vmem:[%s0 + $0x4b8] sm:$0xff]
  %v564 = vld [vmem:[%s0 + $0x4c0] sm:$0xff]
  %v565 = vld [vmem:[%s0 + $0x4c8] sm:$0xff]
  %v566 = vld [vmem:[%s0 + $0x4d0] sm:$0xff]
  %v567 = vld [vmem:[%s0 + $0x4d8] sm:$0xff]
  %v568 = vld [vmem:[%s0 + $0x4e0] sm:$0xff]
  %v569 = vld [vmem:[%s0 + $0x4e8] sm:$0xff]
  %v570 = vld [vmem:[%s0 + $0x4f0] sm:$0xff]
  %v571 = vld [vmem:[%s0 + $0x4f8] sm:$0xff]
  %v572 = vld [vmem:[%s0 + $0x500] sm:$0xff]
  %v573 = vld [vmem:[%s0 + $0x508] sm:$0xff]
  %v574 = vld [vmem:[%s0 + $0x510] sm:$0xff]
  %v575 = vld [vmem:[%s0 + $0x518] sm:$0xff]
  %v576 = vld [vmem:[%s0 + $0x520] sm:$0xff]
  %v577 = vld [vmem:[%s0 + $0x528] sm:$0xff]
  %v578 = vld [vmem:[%s0 + $0x530] sm:$0xff]
  %v579 = vld [vmem:[%s0 + $0x538] sm:$0xff]
  %v580 = vld [vmem:[%s0 + $0x540] sm:$0xff]
  %v581 = vld [vmem:[%s0 + $0x548] sm:$0xff]
  %v582 = vld [vmem:[%s0 + $0x550] sm:$0xff]
  %v583 = vld [vmem:[%s0 + $0x558] sm:$0xff]
  %v584 = vld [vmem:[%s0 + $0x560] sm:$0xff]
  %v585 = vld [vmem:[%s0 + $0x568] sm:$0xff]
  %v586 = vld [vmem:[%s0 + $0x570] sm:$0xff]
  %v587 = vld [vmem:[%s0 + $0x578] sm:$0xff]
  %v588 = vld [vmem:[%s0 + $0x580] sm:$0xff]
  %v589 = vld [vmem:[%s0 + $0x588] sm:$0xff]
  %v590 = vld [vmem:[%s0 + $0x590] sm:$0xff]
  %v591 = vld [vmem:[%s0 + $0x598] sm:$0xff]
  %v592 = vld [vmem:[%s0 + $0x5a0] sm:$0xff]
  %v593 = vld [vmem:[%s0 + $0x5a8] sm:$0xff]
  %v594 = vld [vmem:[%s0 + $0x5b0] sm:$0xff]
  %v595 = vld [vmem:[%s0 + $0x5b8] sm:$0xff]
  %v596 = vld [vmem:[%s0 + $0x5c0] sm:$0xff]
  %v597 = vld [vmem:[%s0 + $0x5c8] sm:$0xff]
  %v598 = vld [vmem:[%s0 + $0x5d0] sm:$0xff]
  %v599 = vld [vmem:[%s0 + $0x5d8] sm:$0xff]
  %v600 = vld [vmem:[%s0 + $0x5e0] sm:$0xff]
  %v601 = vld [vmem:[%s0 + $0x5e8] sm:$0xff]
  %v602 = vld [vmem:[%s0 + $0x5f0] sm:$0xff]
  %v603 = vld [vmem:[%s0 + $0x5f8] sm:$0xff]
  %v604 = vpack.c.bf16 %v414, %v412
  %v605 = vpack.c.bf16 %v415, %v413
  %v606 = vpack.c.bf16 %v418, %v416
  %v607 = vpack.c.bf16 %v419, %v417
  %v608 = vpack.c.bf16 %v422, %v420
  %v609 = vpack.c.bf16 %v423, %v421
  %v610 = vpack.c.bf16 %v426, %v424
  %v611 = vpack.c.bf16 %v427, %v425
  %v612 = vpack.c.bf16 %v430, %v428
  %v613 = vpack.c.bf16 %v431, %v429
  %v614 = vpack.c.bf16 %v434, %v432
  %v615 = vpack.c.bf16 %v435, %v433
  %v616 = vpack.c.bf16 %v438, %v436
  %v617 = vpack.c.bf16 %v439, %v437
  %v618 = vpack.c.bf16 %v442, %v440
  %v619 = vpack.c.bf16 %v443, %v441
  %v620 = vpack.c.bf16 %v446, %v444
  %v621 = vpack.c.bf16 %v447, %v445
  %v622 = vpack.c.bf16 %v450, %v448
  %v623 = vpack.c.bf16 %v451, %v449
  %v624 = vpack.c.bf16 %v454, %v452
  %v625 = vpack.c.bf16 %v455, %v453
  %v626 = vpack.c.bf16 %v458, %v456
  %v627 = vpack.c.bf16 %v459, %v457
  %v628 = vpack.c.bf16 %v462, %v460
  %v629 = vpack.c.bf16 %v463, %v461
  %v630 = vpack.c.bf16 %v466, %v464
  %v631 = vpack.c.bf16 %v467, %v465
  %v632 = vpack.c.bf16 %v470, %v468
  %v633 = vpack.c.bf16 %v471, %v469
  %v634 = vpack.c.bf16 %v474, %v472
  %v635 = vpack.c.bf16 %v475, %v473
  %v636 = vpack.c.bf16 %v478, %v476
  %v637 = vpack.c.bf16 %v479, %v477
  %v638 = vpack.c.bf16 %v482, %v480
  %v639 = vpack.c.bf16 %v483, %v481
  %v640 = vpack.c.bf16 %v486, %v484
  %v641 = vpack.c.bf16 %v487, %v485
  %v642 = vpack.c.bf16 %v490, %v488
  %v643 = vpack.c.bf16 %v491, %v489
  %v644 = vpack.c.bf16 %v494, %v492
  %v645 = vpack.c.bf16 %v495, %v493
  %v646 = vpack.c.bf16 %v498, %v496
  %v647 = vpack.c.bf16 %v499, %v497
  %v648 = vpack.c.bf16 %v502, %v500
  %v649 = vpack.c.bf16 %v503, %v501
  %v650 = vpack.c.bf16 %v506, %v504
  %v651 = vpack.c.bf16 %v507, %v505
  %v652 = vpack.c.bf16 %v510, %v508
  %v653 = vpack.c.bf16 %v511, %v509
  %v654 = vpack.c.bf16 %v514, %v512
  %v655 = vpack.c.bf16 %v515, %v513
  %v656 = vpack.c.bf16 %v518, %v516
  %v657 = vpack.c.bf16 %v519, %v517
  %v658 = vpack.c.bf16 %v522, %v520
  %v659 = vpack.c.bf16 %v523, %v521
  %v660 = vpack.c.bf16 %v526, %v524
  %v661 = vpack.c.bf16 %v527, %v525
  %v662 = vpack.c.bf16 %v530, %v528
  %v663 = vpack.c.bf16 %v531, %v529
  %v664 = vpack.c.bf16 %v534, %v532
  %v665 = vpack.c.bf16 %v535, %v533
  %v666 = vpack.c.bf16 %v538, %v536
  %v667 = vpack.c.bf16 %v539, %v537
  %v668 = vpack.c.bf16 %v542, %v540
  %v669 = vpack.c.bf16 %v543, %v541
  %v670 = vpack.c.bf16 %v546, %v544
  %v671 = vpack.c.bf16 %v547, %v545
  %v672 = vpack.c.bf16 %v550, %v548
  %v673 = vpack.c.bf16 %v551, %v549
  %v674 = vpack.c.bf16 %v554, %v552
  %v675 = vpack.c.bf16 %v555, %v553
  %v676 = vpack.c.bf16 %v558, %v556
  %v677 = vpack.c.bf16 %v559, %v557
  %v678 = vpack.c.bf16 %v562, %v560
  %v679 = vpack.c.bf16 %v563, %v561
  %v680 = vpack.c.bf16 %v566, %v564
  %v681 = vpack.c.bf16 %v567, %v565
  %v682 = vpack.c.bf16 %v570, %v568
  %v683 = vpack.c.bf16 %v571, %v569
  %v684 = vpack.c.bf16 %v574, %v572
  %v685 = vpack.c.bf16 %v575, %v573
  %v686 = vpack.c.bf16 %v578, %v576
  %v687 = vpack.c.bf16 %v579, %v577
  %v688 = vpack.c.bf16 %v582, %v580
  %v689 = vpack.c.bf16 %v583, %v581
  %v690 = vpack.c.bf16 %v586, %v584
  %v691 = vpack.c.bf16 %v587, %v585
  %v692 = vpack.c.bf16 %v590, %v588
  %v693 = vpack.c.bf16 %v591, %v589
  %v694 = vpack.c.bf16 %v594, %v592
  %v695 = vpack.c.bf16 %v595, %v593
  %v696 = vpack.c.bf16 %v598, %v596
  %v697 = vpack.c.bf16 %v599, %v597
  %v698 = vpack.c.bf16 %v602, %v600
  %v699 = vpack.c.bf16 %v603, %v601
  %700 = vmatprep.subr.bf16.mxu0 %v605
  %701 = vmatpush1.bf16.msra.mxu0 %v604
  %702 = vmatprep.subr.bf16.mxu0 %v607
  %703 = vmatpush1.bf16.msra.mxu0 %v606
  %704 = vmatprep.subr.bf16.mxu0 %v609
  %705 = vmatpush1.bf16.msra.mxu0 %v608
  %706 = vmatprep.subr.bf16.mxu0 %v611
  %707 = vmatpush1.bf16.msra.mxu0 %v610
  %708 = vmatprep.subr.bf16.mxu0 %v613
  %709 = vmatpush1.bf16.msra.mxu0 %v612
  %710 = vmatprep.subr.bf16.mxu0 %v615
  %711 = vmatpush1.bf16.msra.mxu0 %v614
  %712 = vmatprep.subr.bf16.mxu0 %v617
  %713 = vmatpush1.bf16.msra.mxu0 %v616
  %714 = vmatprep.subr.bf16.mxu0 %v619
  %715 = vmatpush1.bf16.msra.mxu0 %v618
  %716 = vmatprep.subr.bf16.mxu0 %v621
  %717 = vmatpush1.bf16.msra.mxu0 %v620
  %718 = vmatprep.subr.bf16.mxu0 %v623
  %719 = vmatpush1.bf16.msra.mxu0 %v622
  %720 = vmatprep.subr.bf16.mxu0 %v625
  %721 = vmatpush1.bf16.msra.mxu0 %v624
  %722 = vmatprep.subr.bf16.mxu0 %v627
  %723 = vmatpush1.bf16.msra.mxu0 %v626
  %724 = vmatprep.subr.bf16.mxu0 %v629
  %725 = vmatpush1.bf16.msra.mxu0 %v628
  %726 = vmatprep.subr.bf16.mxu0 %v631
  %727 = vmatpush1.bf16.msra.mxu0 %v630
  %728 = vmatprep.subr.bf16.mxu0 %v633
  %729 = vmatpush1.bf16.msra.mxu0 %v632
  %730 = vmatprep.subr.bf16.mxu0 %v635
  %731 = vmatpush1.bf16.msra.mxu0 %v634
  %732 = vmatprep.mubr.bf16.mxu0 %v341
  %733 = vmatmul.mubr.bf16.gmra.mrb[0].mxu0 %v340
  %v734 = vpop.f32.mrb[0].mxu0
  %v735 = vadd.f32 0.0, %v734
  %v736 = vpop.f32.mrb[0].mxu0
  %v737 = vadd.f32 0.0, %v736
  %v738 = vpop.f32.mrb[0].mxu0
  %v739 = vadd.f32 0.0, %v738
  %v740 = vpop.f32.mrb[0].mxu0
  %v741 = vadd.f32 0.0, %v740
  %742 = vmatprep.mubr.bf16.mxu0 %v347
  %743 = vmatmul.mubr.bf16.gmra.mrb[0].mxu0 %v346
  %v744 = vpop.f32.mrb[0].mxu0
  %v745 = vadd.f32 0.0, %v744
  %v746 = vpop.f32.mrb[0].mxu0
  %v747 = vadd.f32 0.0, %v746
  %v748 = vpop.f32.mrb[0].mxu0
  %v749 = vadd.f32 0.0, %v748
  %v750 = vpop.f32.mrb[0].mxu0
  %v751 = vadd.f32 0.0, %v750
  %752 = vmatprep.mubr.bf16.mxu0 %v353
  %753 = vmatmul.mubr.bf16.gmra.mrb[0].mxu0 %v352
  %v754 = vpop.f32.mrb[0].mxu0
  %v755 = vadd.f32 0.0, %v754
  %v756 = vpop.f32.mrb[0].mxu0
  %v757 = vadd.f32 0.0, %v756
  %v758 = vpop.f32.mrb[0].mxu0
  %v759 = vadd.f32 0.0, %v758
  %v760 = vpop.f32.mrb[0].mxu0
  %v761 = vadd.f32 0.0, %v760
  %762 = vmatprep.mubr.bf16.mxu0 %v359
  %763 = vmatmul.mubr.bf16.gmra.mrb[0].mxu0 %v358
  %v764 = vpop.f32.mrb[0].mxu0
  %v765 = vadd.f32 0.0, %v764
  %v766 = vpop.f32.mrb[0].mxu0
  %v767 = vadd.f32 0.0, %v766
  %v768 = vpop.f32.mrb[0].mxu0
  %v769 = vadd.f32 0.0, %v768
  %v770 = vpop.f32.mrb[0].mxu0
  %v771 = vadd.f32 0.0, %v770
  %772 = vmatprep.mubr.bf16.mxu0 %v365
  %773 = vmatmul.mubr.bf16.gmra.mrb[0].mxu0 %v364
  %v774 = vpop.f32.mrb[0].mxu0
  %v775 = vadd.f32 0.0, %v774
  %v776 = vpop.f32.mrb[0].mxu0
  %v777 = vadd.f32 0.0, %v776
  %v778 = vpop.f32.mrb[0].mxu0
  %v779 = vadd.f32 0.0, %v778
  %v780 = vpop.f32.mrb[0].mxu0
  %v781 = vadd.f32 0.0, %v780
  %782 = vmatprep.mubr.bf16.mxu0 %v371
  %783 = vmatmul.mubr.bf16.gmra.mrb[0].mxu0 %v370
  %v784 = vpop.f32.mrb[0].mxu0
  %v785 = vadd.f32 0.0, %v784
  %v786 = vpop.f32.mrb[0].mxu0
  %v787 = vadd.f32 0.0, %v786
  %v788 = vpop.f32.mrb[0].mxu0
  %v789 = vadd.f32 0.0, %v788
  %v790 = vpop.f32.mrb[0].mxu0
  %v791 = vadd.f32 0.0, %v790
  %792 = vmatprep.mubr.bf16.mxu0 %v377
  %793 = vmatmul.mubr.bf16.gmra.mrb[0].mxu0 %v376
  %v794 = vpop.f32.mrb[0].mxu0
  %v795 = vadd.f32 0.0, %v794
  %v796 = vpop.f32.mrb[0].mxu0
  %v797 = vadd.f32 0.0, %v796
  %v798 = vpop.f32.mrb[0].mxu0
  %v799 = vadd.f32 0.0, %v798
  %v800 = vpop.f32.mrb[0].mxu0
  %v801 = vadd.f32 0.0, %v800
  %802 = vmatprep.mubr.bf16.mxu0 %v383
  %803 = vmatmul.mubr.bf16.gmra.mrb[0].mxu0 %v382
  %v804 = vpop.f32.mrb[0].mxu0
  %v805 = vadd.f32 0.0, %v804
  %v806 = vpop.f32.mrb[0].mxu0
  %v807 = vadd.f32 0.0, %v806
  %v808 = vpop.f32.mrb[0].mxu0
  %v809 = vadd.f32 0.0, %v808
  %v810 = vpop.f32.mrb[0].mxu0
  %v811 = vadd.f32 0.0, %v810
  %812 = vmatprep.mubr.bf16.mxu0 %v389
  %813 = vmatmul.mubr.bf16.gmra.mrb[0].mxu0 %v388
  %v814 = vpop.f32.mrb[0].mxu0
  %v815 = vadd.f32 0.0, %v814
  %v816 = vpop.f32.mrb[0].mxu0
  %v817 = vadd.f32 0.0, %v816
  %v818 = vpop.f32.mrb[0].mxu0
  %v819 = vadd.f32 0.0, %v818
  %v820 = vpop.f32.mrb[0].mxu0
  %v821 = vadd.f32 0.0, %v820
  %822 = vmatprep.mubr.bf16.mxu0 %v395
  %823 = vmatmul.mubr.bf16.gmra.mrb[0].mxu0 %v394
  %v824 = vpop.f32.mrb[0].mxu0
  %v825 = vadd.f32 0.0, %v824
  %v826 = vpop.f32.mrb[0].mxu0
  %v827 = vadd.f32 0.0, %v826
  %v828 = vpop.f32.mrb[0].mxu0
  %v829 = vadd.f32 0.0, %v828
  %v830 = vpop.f32.mrb[0].mxu0
  %v831 = vadd.f32 0.0, %v830
  %832 = vmatprep.mubr.bf16.mxu0 %v401
  %833 = vmatmul.mubr.bf16.gmra.mrb[0].mxu0 %v400
  %v834 = vpop.f32.mrb[0].mxu0
  %v835 = vadd.f32 0.0, %v834
  %v836 = vpop.f32.mrb[0].mxu0
  %v837 = vadd.f32 0.0, %v836
  %v838 = vpop.f32.mrb[0].mxu0
  %v839 = vadd.f32 0.0, %v838
  %v840 = vpop.f32.mrb[0].mxu0
  %v841 = vadd.f32 0.0, %v840
  %842 = vmatprep.mubr.bf16.mxu0 %v407
  %843 = vmatmul.mubr.bf16.gmra.mrb[0].mxu0 %v406
  %v844 = vpop.f32.mrb[0].mxu0
  %v845 = vadd.f32 0.0, %v844
  %v846 = vpop.f32.mrb[0].mxu0
  %v847 = vadd.f32 0.0, %v846
  %v848 = vpop.f32.mrb[0].mxu0
  %v849 = vadd.f32 0.0, %v848
  %v850 = vpop.f32.mrb[0].mxu0
  %v851 = vadd.f32 0.0, %v850
  %852 = vdwg.mxu0
  %853 = vmatprep.subr.bf16.mxu0 %v637
  %854 = vmatpush1.bf16.msra.mxu0 %v636
  %855 = vmatprep.subr.bf16.mxu0 %v639
  %856 = vmatpush1.bf16.msra.mxu0 %v638
  %857 = vmatprep.subr.bf16.mxu0 %v641
  %858 = vmatpush1.bf16.msra.mxu0 %v640
  %859 = vmatprep.subr.bf16.mxu0 %v643
  %860 = vmatpush1.bf16.msra.mxu0 %v642
  %861 = vmatprep.subr.bf16.mxu0 %v645
  %862 = vmatpush1.bf16.msra.mxu0 %v644
  %863 = vmatprep.subr.bf16.mxu0 %v647
  %864 = vmatpush1.bf16.msra.mxu0 %v646
  %865 = vmatprep.subr.bf16.mxu0 %v649
  %866 = vmatpush1.bf16.msra.mxu0 %v648
  %867 = vmatprep.subr.bf16.mxu0 %v651
  %868 = vmatpush1.bf16.msra.mxu0 %v650
  %869 = vmatprep.subr.bf16.mxu0 %v653
  %870 = vmatpush1.bf16.msra.mxu0 %v652
  %871 = vmatprep.subr.bf16.mxu0 %v655
  %872 = vmatpush1.bf16.msra.mxu0 %v654
  %873 = vmatprep.subr.bf16.mxu0 %v657
  %874 = vmatpush1.bf16.msra.mxu0 %v656
  %875 = vmatprep.subr.bf16.mxu0 %v659
  %876 = vmatpush1.bf16.msra.mxu0 %v658
  %877 = vmatprep.subr.bf16.mxu0 %v661
  %878 = vmatpush1.bf16.msra.mxu0 %v660
  %879 = vmatprep.subr.bf16.mxu0 %v663
  %880 = vmatpush1.bf16.msra.mxu0 %v662
  %881 = vmatprep.subr.bf16.mxu0 %v665
  %882 = vmatpush1.bf16.msra.mxu0 %v664
  %883 = vmatprep.subr.bf16.mxu0 %v667
  %884 = vmatpush1.bf16.msra.mxu0 %v666
  %885 = vmatprep.mubr.bf16.mxu0 %v343
  %886 = vmatmul.mubr.bf16.gmra.mrb[0].mxu0 %v342
  %v887 = vpop.f32.mrb[0].mxu0
  %v888 = vadd.f32 %v735, %v887
  %v889 = vpop.f32.mrb[0].mxu0
  %v890 = vadd.f32 %v737, %v889
  %v891 = vpop.f32.mrb[0].mxu0
  %v892 = vadd.f32 %v739, %v891
  %v893 = vpop.f32.mrb[0].mxu0
  %v894 = vadd.f32 %v741, %v893
  %895 = vmatprep.mubr.bf16.mxu0 %v349
  %896 = vmatmul.mubr.bf16.gmra.mrb[0].mxu0 %v348
  %v897 = vpop.f32.mrb[0].mxu0
  %v898 = vadd.f32 %v745, %v897
  %v899 = vpop.f32.mrb[0].mxu0
  %v900 = vadd.f32 %v747, %v899
  %v901 = vpop.f32.mrb[0].mxu0
  %v902 = vadd.f32 %v749, %v901
  %v903 = vpop.f32.mrb[0].mxu0
  %v904 = vadd.f32 %v751, %v903
  %905 = vmatprep.mubr.bf16.mxu0 %v355
  %906 = vmatmul.mubr.bf16.gmra.mrb[0].mxu0 %v354
  %v907 = vpop.f32.mrb[0].mxu0
  %v908 = vadd.f32 %v755, %v907
  %v909 = vpop.f32.mrb[0].mxu0
  %v910 = vadd.f32 %v757, %v909
  %v911 = vpop.f32.mrb[0].mxu0
  %v912 = vadd.f32 %v759, %v911
  %v913 = vpop.f32.mrb[0].mxu0
  %v914 = vadd.f32 %v761, %v913
  %915 = vmatprep.mubr.bf16.mxu0 %v361
  %916 = vmatmul.mubr.bf16.gmra.mrb[0].mxu0 %v360
  %v917 = vpop.f32.mrb[0].mxu0
  %v918 = vadd.f32 %v765, %v917
  %v919 = vpop.f32.mrb[0].mxu0
  %v920 = vadd.f32 %v767, %v919
  %v921 = vpop.f32.mrb[0].mxu0
  %v922 = vadd.f32 %v769, %v921
  %v923 = vpop.f32.mrb[0].mxu0
  %v924 = vadd.f32 %v771, %v923
  %925 = vmatprep.mubr.bf16.mxu0 %v367
  %926 = vmatmul.mubr.bf16.gmra.mrb[0].mxu0 %v366
  %v927 = vpop.f32.mrb[0].mxu0
  %v928 = vadd.f32 %v775, %v927
  %v929 = vpop.f32.mrb[0].mxu0
  %v930 = vadd.f32 %v777, %v929
  %v931 = vpop.f32.mrb[0].mxu0
  %v932 = vadd.f32 %v779, %v931
  %v933 = vpop.f32.mrb[0].mxu0
  %v934 = vadd.f32 %v781, %v933
  %935 = vmatprep.mubr.bf16.mxu0 %v373
  %936 = vmatmul.mubr.bf16.gmra.mrb[0].mxu0 %v372
  %v937 = vpop.f32.mrb[0].mxu0
  %v938 = vadd.f32 %v785, %v937
  %v939 = vpop.f32.mrb[0].mxu0
  %v940 = vadd.f32 %v787, %v939
  %v941 = vpop.f32.mrb[0].mxu0
  %v942 = vadd.f32 %v789, %v941
  %v943 = vpop.f32.mrb[0].mxu0
  %v944 = vadd.f32 %v791, %v943
  %945 = vmatprep.mubr.bf16.mxu0 %v379
  %946 = vmatmul.mubr.bf16.gmra.mrb[0].mxu0 %v378
  %v947 = vpop.f32.mrb[0].mxu0
  %v948 = vadd.f32 %v795, %v947
  %v949 = vpop.f32.mrb[0].mxu0
  %v950 = vadd.f32 %v797, %v949
  %v951 = vpop.f32.mrb[0].mxu0
  %v952 = vadd.f32 %v799, %v951
  %v953 = vpop.f32.mrb[0].mxu0
  %v954 = vadd.f32 %v801, %v953
  %955 = vmatprep.mubr.bf16.mxu0 %v385
  %956 = vmatmul.mubr.bf16.gmra.mrb[0].mxu0 %v384
  %v957 = vpop.f32.mrb[0].mxu0
  %v958 = vadd.f32 %v805, %v957
  %v959 = vpop.f32.mrb[0].mxu0
  %v960 = vadd.f32 %v807, %v959
  %v961 = vpop.f32.mrb[0].mxu0
  %v962 = vadd.f32 %v809, %v961
  %v963 = vpop.f32.mrb[0].mxu0
  %v964 = vadd.f32 %v811, %v963
  %965 = vmatprep.mubr.bf16.mxu0 %v391
  %966 = vmatmul.mubr.bf16.gmra.mrb[0].mxu0 %v390
  %v967 = vpop.f32.mrb[0].mxu0
  %v968 = vadd.f32 %v815, %v967
  %v969 = vpop.f32.mrb[0].mxu0
  %v970 = vadd.f32 %v817, %v969
  %v971 = vpop.f32.mrb[0].mxu0
  %v972 = vadd.f32 %v819, %v971
  %v973 = vpop.f32.mrb[0].mxu0
  %v974 = vadd.f32 %v821, %v973
  %975 = vmatprep.mubr.bf16.mxu0 %v397
  %976 = vmatmul.mubr.bf16.gmra.mrb[0].mxu0 %v396
  %v977 = vpop.f32.mrb[0].mxu0
  %v978 = vadd.f32 %v825, %v977
  %v979 = vpop.f32.mrb[0].mxu0
  %v980 = vadd.f32 %v827, %v979
  %v981 = vpop.f32.mrb[0].mxu0
  %v982 = vadd.f32 %v829, %v981
  %v983 = vpop.f32.mrb[0].mxu0
  %v984 = vadd.f32 %v831, %v983
  %985 = vmatprep.mubr.bf16.mxu0 %v403
  %986 = vmatmul.mubr.bf16.gmra.mrb[0].mxu0 %v402
  %v987 = vpop.f32.mrb[0].mxu0
  %v988 = vadd.f32 %v835, %v987
  %v989 = vpop.f32.mrb[0].mxu0
  %v990 = vadd.f32 %v837, %v989
  %v991 = vpop.f32.mrb[0].mxu0
  %v992 = vadd.f32 %v839, %v991
  %v993 = vpop.f32.mrb[0].mxu0
  %v994 = vadd.f32 %v841, %v993
  %995 = vmatprep.mubr.bf16.mxu0 %v409
  %996 = vmatmul.mubr.bf16.gmra.mrb[0].mxu0 %v408
  %v997 = vpop.f32.mrb[0].mxu0
  %v998 = vadd.f32 %v845, %v997
  %v999 = vpop.f32.mrb[0].mxu0
  %v1000 = vadd.f32 %v847, %v999
  %v1001 = vpop.f32.mrb[0].mxu0
  %v1002 = vadd.f32 %v849, %v1001
  %v1003 = vpop.f32.mrb[0].mxu0
  %v1004 = vadd.f32 %v851, %v1003
  %1005 = vdwg.mxu0
  %1006 = vmatprep.subr.bf16.mxu0 %v669
  %1007 = vmatpush1.bf16.msra.mxu0 %v668
  %1008 = vmatprep.subr.bf16.mxu0 %v671
  %1009 = vmatpush1.bf16.msra.mxu0 %v670
  %1010 = vmatprep.subr.bf16.mxu0 %v673
  %1011 = vmatpush1.bf16.msra.mxu0 %v672
  %1012 = vmatprep.subr.bf16.mxu0 %v675
  %1013 = vmatpush1.bf16.msra.mxu0 %v674
  %1014 = vmatprep.subr.bf16.mxu0 %v677
  %1015 = vmatpush1.bf16.msra.mxu0 %v676
  %1016 = vmatprep.subr.bf16.mxu0 %v679
  %1017 = vmatpush1.bf16.msra.mxu0 %v678
  %1018 = vmatprep.subr.bf16.mxu0 %v681
  %1019 = vmatpush1.bf16.msra.mxu0 %v680
  %1020 = vmatprep.subr.bf16.mxu0 %v683
  %1021 = vmatpush1.bf16.msra.mxu0 %v682
  %1022 = vmatprep.subr.bf16.mxu0 %v685
  %1023 = vmatpush1.bf16.msra.mxu0 %v684
  %1024 = vmatprep.subr.bf16.mxu0 %v687
  %1025 = vmatpush1.bf16.msra.mxu0 %v686
  %1026 = vmatprep.subr.bf16.mxu0 %v689
  %1027 = vmatpush1.bf16.msra.mxu0 %v688
  %1028 = vmatprep.subr.bf16.mxu0 %v691
  %1029 = vmatpush1.bf16.msra.mxu0 %v690
  %1030 = vmatprep.subr.bf16.mxu0 %v693
  %1031 = vmatpush1.bf16.msra.mxu0 %v692
  %1032 = vmatprep.subr.bf16.mxu0 %v695
  %1033 = vmatpush1.bf16.msra.mxu0 %v694
  %1034 = vmatprep.subr.bf16.mxu0 %v697
  %1035 = vmatpush1.bf16.msra.mxu0 %v696
  %1036 = vmatprep.subr.bf16.mxu0 %v699
  %1037 = vmatpush1.bf16.msra.mxu0 %v698
  %1038 = vmatprep.mubr.bf16.mxu0 %v345
  %1039 = vmatmul.mubr.bf16.gmra.mrb[0].mxu0 %v344
  %v1040 = vpop.f32.mrb[0].mxu0
  %v1041 = vadd.f32 %v888, %v1040
  %v1042 = vpop.f32.mrb[0].mxu0
  %v1043 = vadd.f32 %v890, %v1042
  %v1044 = vpop.f32.mrb[0].mxu0
  %v1045 = vadd.f32 %v892, %v1044
  %v1046 = vpop.f32.mrb[0].mxu0
  %v1047 = vadd.f32 %v894, %v1046
  %1048 = vmatprep.mubr.bf16.mxu0 %v351
  %1049 = vmatmul.mubr.bf16.gmra.mrb[0].mxu0 %v350
  %v1050 = vpop.f32.mrb[0].mxu0
  %v1051 = vadd.f32 %v898, %v1050
  %v1052 = vpop.f32.mrb[0].mxu0
  %v1053 = vadd.f32 %v900, %v1052
  %v1054 = vpop.f32.mrb[0].mxu0
  %v1055 = vadd.f32 %v902, %v1054
  %v1056 = vpop.f32.mrb[0].mxu0
  %v1057 = vadd.f32 %v904, %v1056
  %1058 = vmatprep.mubr.bf16.mxu0 %v357
  %1059 = vmatmul.mubr.bf16.gmra.mrb[0].mxu0 %v356
  %v1060 = vpop.f32.mrb[0].mxu0
  %v1061 = vadd.f32 %v908, %v1060
  %v1062 = vpop.f32.mrb[0].mxu0
  %v1063 = vadd.f32 %v910, %v1062
  %v1064 = vpop.f32.mrb[0].mxu0
  %v1065 = vadd.f32 %v912, %v1064
  %v1066 = vpop.f32.mrb[0].mxu0
  %v1067 = vadd.f32 %v914, %v1066
  %1068 = vmatprep.mubr.bf16.mxu0 %v363
  %1069 = vmatmul.mubr.bf16.gmra.mrb[0].mxu0 %v362
  %v1070 = vpop.f32.mrb[0].mxu0
  %v1071 = vadd.f32 %v918, %v1070
  %v1072 = vpop.f32.mrb[0].mxu0
  %v1073 = vadd.f32 %v920, %v1072
  %v1074 = vpop.f32.mrb[0].mxu0
  %v1075 = vadd.f32 %v922, %v1074
  %v1076 = vpop.f32.mrb[0].mxu0
  %v1077 = vadd.f32 %v924, %v1076
  %1078 = vmatprep.mubr.bf16.mxu0 %v369
  %1079 = vmatmul.mubr.bf16.gmra.mrb[0].mxu0 %v368
  %v1080 = vpop.f32.mrb[0].mxu0
  %v1081 = vadd.f32 %v928, %v1080
  %v1082 = vpop.f32.mrb[0].mxu0
  %v1083 = vadd.f32 %v930, %v1082
  %v1084 = vpop.f32.mrb[0].mxu0
  %v1085 = vadd.f32 %v932, %v1084
  %v1086 = vpop.f32.mrb[0].mxu0
  %v1087 = vadd.f32 %v934, %v1086
  %1088 = vmatprep.mubr.bf16.mxu0 %v375
  %1089 = vmatmul.mubr.bf16.gmra.mrb[0].mxu0 %v374
  %v1090 = vpop.f32.mrb[0].mxu0
  %v1091 = vadd.f32 %v938, %v1090
  %v1092 = vpop.f32.mrb[0].mxu0
  %v1093 = vadd.f32 %v940, %v1092
  %v1094 = vpop.f32.mrb[0].mxu0
  %v1095 = vadd.f32 %v942, %v1094
  %v1096 = vpop.f32.mrb[0].mxu0
  %v1097 = vadd.f32 %v944, %v1096
  %1098 = vmatprep.mubr.bf16.mxu0 %v381
  %1099 = vmatmul.mubr.bf16.gmra.mrb[0].mxu0 %v380
  %v1100 = vpop.f32.mrb[0].mxu0
  %v1101 = vadd.f32 %v948, %v1100
  %v1102 = vpop.f32.mrb[0].mxu0
  %v1103 = vadd.f32 %v950, %v1102
  %v1104 = vpop.f32.mrb[0].mxu0
  %v1105 = vadd.f32 %v952, %v1104
  %v1106 = vpop.f32.mrb[0].mxu0
  %v1107 = vadd.f32 %v954, %v1106
  %1108 = vmatprep.mubr.bf16.mxu0 %v387
  %1109 = vmatmul.mubr.bf16.gmra.mrb[0].mxu0 %v386
  %v1110 = vpop.f32.mrb[0].mxu0
  %v1111 = vadd.f32 %v958, %v1110
  %v1112 = vpop.f32.mrb[0].mxu0
  %v1113 = vadd.f32 %v960, %v1112
  %v1114 = vpop.f32.mrb[0].mxu0
  %v1115 = vadd.f32 %v962, %v1114
  %v1116 = vpop.f32.mrb[0].mxu0
  %v1117 = vadd.f32 %v964, %v1116
  %1118 = vmatprep.mubr.bf16.mxu0 %v393
  %1119 = vmatmul.mubr.bf16.gmra.mrb[0].mxu0 %v392
  %v1120 = vpop.f32.mrb[0].mxu0
  %v1121 = vadd.f32 %v968, %v1120
  %v1122 = vpop.f32.mrb[0].mxu0
  %v1123 = vadd.f32 %v970, %v1122
  %v1124 = vpop.f32.mrb[0].mxu0
  %v1125 = vadd.f32 %v972, %v1124
  %v1126 = vpop.f32.mrb[0].mxu0
  %v1127 = vadd.f32 %v974, %v1126
  %1128 = vmatprep.mubr.bf16.mxu0 %v399
  %1129 = vmatmul.mubr.bf16.gmra.mrb[0].mxu0 %v398
  %v1130 = vpop.f32.mrb[0].mxu0
  %v1131 = vadd.f32 %v978, %v1130
  %v1132 = vpop.f32.mrb[0].mxu0
  %v1133 = vadd.f32 %v980, %v1132
  %v1134 = vpop.f32.mrb[0].mxu0
  %v1135 = vadd.f32 %v982, %v1134
  %v1136 = vpop.f32.mrb[0].mxu0
  %v1137 = vadd.f32 %v984, %v1136
  %1138 = vmatprep.mubr.bf16.mxu0 %v405
  %1139 = vmatmul.mubr.bf16.gmra.mrb[0].mxu0 %v404
  %v1140 = vpop.f32.mrb[0].mxu0
  %v1141 = vadd.f32 %v988, %v1140
  %v1142 = vpop.f32.mrb[0].mxu0
  %v1143 = vadd.f32 %v990, %v1142
  %v1144 = vpop.f32.mrb[0].mxu0
  %v1145 = vadd.f32 %v992, %v1144
  %v1146 = vpop.f32.mrb[0].mxu0
  %v1147 = vadd.f32 %v994, %v1146
  %1148 = vmatprep.mubr.bf16.mxu0 %v411
  %1149 = vmatmul.mubr.bf16.gmra.mrb[0].mxu0 %v410
  %v1150 = vpop.f32.mrb[0].mxu0
  %v1151 = vadd.f32 %v998, %v1150
  %v1152 = vpop.f32.mrb[0].mxu0
  %v1153 = vadd.f32 %v1000, %v1152
  %v1154 = vpop.f32.mrb[0].mxu0
  %v1155 = vadd.f32 %v1002, %v1154
  %v1156 = vpop.f32.mrb[0].mxu0
  %v1157 = vadd.f32 %v1004, %v1156
  %1158 = vdwg.mxu0
  %vm1159 = vcmask 556032
  %v1160 = vsel %vm1159, %v1043, 0.0
  %v1161 = vadd.f32 %v1041, %v1160
  %1162 = vadd.xlane.f32.xlu0 %v1161
  %v1163 = vpop.xlane.xlu0 %1162
  %v1164 = vsel %vm1159, %v1047, 0.0
  %v1165 = vadd.f32 %v1045, %v1164
  %1166 = vadd.xlane.f32.xlu0 %v1165
  %v1167 = vpop.xlane.xlu0 %1166
  %v1168 = vsel %vm1159, %v1053, 0.0
  %v1169 = vadd.f32 %v1051, %v1168
  %1170 = vadd.xlane.f32.xlu0 %v1169
  %v1171 = vpop.xlane.xlu0 %1170
  %v1172 = vsel %vm1159, %v1057, 0.0
  %v1173 = vadd.f32 %v1055, %v1172
  %1174 = vadd.xlane.f32.xlu0 %v1173
  %v1175 = vpop.xlane.xlu0 %1174
  %v1176 = vsel %vm1159, %v1063, 0.0
  %v1177 = vadd.f32 %v1061, %v1176
  %1178 = vadd.xlane.f32.xlu0 %v1177
  %v1179 = vpop.xlane.xlu0 %1178
  %v1180 = vsel %vm1159, %v1067, 0.0
  %v1181 = vadd.f32 %v1065, %v1180
  %1182 = vadd.xlane.f32.xlu0 %v1181
  %v1183 = vpop.xlane.xlu0 %1182
  %v1184 = vsel %vm1159, %v1073, 0.0
  %v1185 = vadd.f32 %v1071, %v1184
  %1186 = vadd.xlane.f32.xlu0 %v1185
  %v1187 = vpop.xlane.xlu0 %1186
  %v1188 = vsel %vm1159, %v1077, 0.0
  %v1189 = vadd.f32 %v1075, %v1188
  %1190 = vadd.xlane.f32.xlu0 %v1189
  %v1191 = vpop.xlane.xlu0 %1190
  %v1192 = vsel %vm1159, %v1083, 0.0
  %v1193 = vadd.f32 %v1081, %v1192
  %1194 = vadd.xlane.f32.xlu0 %v1193
  %v1195 = vpop.xlane.xlu0 %1194
  %v1196 = vsel %vm1159, %v1087, 0.0
  %v1197 = vadd.f32 %v1085, %v1196
  %1198 = vadd.xlane.f32.xlu0 %v1197
  %v1199 = vpop.xlane.xlu0 %1198
  %v1200 = vsel %vm1159, %v1093, 0.0
  %v1201 = vadd.f32 %v1091, %v1200
  %1202 = vadd.xlane.f32.xlu0 %v1201
  %v1203 = vpop.xlane.xlu0 %1202
  %v1204 = vsel %vm1159, %v1097, 0.0
  %v1205 = vadd.f32 %v1095, %v1204
  %1206 = vadd.xlane.f32.xlu0 %v1205
  %v1207 = vpop.xlane.xlu0 %1206
  %v1208 = vsel %vm1159, %v1103, 0.0
  %v1209 = vadd.f32 %v1101, %v1208
  %1210 = vadd.xlane.f32.xlu0 %v1209
  %v1211 = vpop.xlane.xlu0 %1210
  %v1212 = vsel %vm1159, %v1107, 0.0
  %v1213 = vadd.f32 %v1105, %v1212
  %1214 = vadd.xlane.f32.xlu0 %v1213
  %v1215 = vpop.xlane.xlu0 %1214
  %v1216 = vsel %vm1159, %v1113, 0.0
  %v1217 = vadd.f32 %v1111, %v1216
  %1218 = vadd.xlane.f32.xlu0 %v1217
  %v1219 = vpop.xlane.xlu0 %1218
  %v1220 = vsel %vm1159, %v1117, 0.0
  %v1221 = vadd.f32 %v1115, %v1220
  %1222 = vadd.xlane.f32.xlu0 %v1221
  %v1223 = vpop.xlane.xlu0 %1222
  %v1224 = vsel %vm1159, %v1123, 0.0
  %v1225 = vadd.f32 %v1121, %v1224
  %1226 = vadd.xlane.f32.xlu0 %v1225
  %v1227 = vpop.xlane.xlu0 %1226
  %v1228 = vsel %vm1159, %v1127, 0.0
  %v1229 = vadd.f32 %v1125, %v1228
  %1230 = vadd.xlane.f32.xlu0 %v1229
  %v1231 = vpop.xlane.xlu0 %1230
  %v1232 = vsel %vm1159, %v1133, 0.0
  %v1233 = vadd.f32 %v1131, %v1232
  %1234 = vadd.xlane.f32.xlu0 %v1233
  %v1235 = vpop.xlane.xlu0 %1234
  %v1236 = vsel %vm1159, %v1137, 0.0
  %v1237 = vadd.f32 %v1135, %v1236
  %1238 = vadd.xlane.f32.xlu0 %v1237
  %v1239 = vpop.xlane.xlu0 %1238
  %v1240 = vsel %vm1159, %v1143, 0.0
  %v1241 = vadd.f32 %v1141, %v1240
  %1242 = vadd.xlane.f32.xlu0 %v1241
  %v1243 = vpop.xlane.xlu0 %1242
  %v1244 = vsel %vm1159, %v1147, 0.0
  %v1245 = vadd.f32 %v1145, %v1244
  %1246 = vadd.xlane.f32.xlu0 %v1245
  %v1247 = vpop.xlane.xlu0 %1246
  %v1248 = vsel %vm1159, %v1153, 0.0
  %v1249 = vadd.f32 %v1151, %v1248
  %1250 = vadd.xlane.f32.xlu0 %v1249
  %v1251 = vpop.xlane.xlu0 %1250
  %v1252 = vsel %vm1159, %v1157, 0.0
  %v1253 = vadd.f32 %v1155, %v1252
  %1254 = vadd.xlane.f32.xlu0 %v1253
  %v1255 = vpop.xlane.xlu0 %1254
  %v1256 = vmul.f32 %v1163, 0.0051020407
  %v1257 = vmul.f32 %v1167, 0.0051020407
  %v1258 = vmul.f32 %v1171, 0.0051020407
  %v1259 = vmul.f32 %v1175, 0.0051020407
  %v1260 = vmul.f32 %v1179, 0.0051020407
  %v1261 = vmul.f32 %v1183, 0.0051020407
  %v1262 = vmul.f32 %v1187, 0.0051020407
  %v1263 = vmul.f32 %v1191, 0.0051020407
  %v1264 = vmul.f32 %v1195, 0.0051020407
  %v1265 = vmul.f32 %v1199, 0.0051020407
  %v1266 = vmul.f32 %v1203, 0.0051020407
  %v1267 = vmul.f32 %v1207, 0.0051020407
  %v1268 = vmul.f32 %v1211, 0.0051020407
  %v1269 = vmul.f32 %v1215, 0.0051020407
  %v1270 = vmul.f32 %v1219, 0.0051020407
  %v1271 = vmul.f32 %v1223, 0.0051020407
  %v1272 = vmul.f32 %v1227, 0.0051020407
  %v1273 = vmul.f32 %v1231, 0.0051020407
  %v1274 = vmul.f32 %v1235, 0.0051020407
  %v1275 = vmul.f32 %v1239, 0.0051020407
  %v1276 = vmul.f32 %v1243, 0.0051020407
  %v1277 = vmul.f32 %v1247, 0.0051020407
  %v1278 = vmul.f32 %v1251, 0.0051020407
  %v1279 = vmul.f32 %v1255, 0.0051020407
  %v1280 = vmul.f32 %v1041, %v1041
  %v1281 = vmul.f32 %v1043, %v1043
  %v1282 = vmul.f32 %v1045, %v1045
  %v1283 = vmul.f32 %v1047, %v1047
  %v1284 = vmul.f32 %v1051, %v1051
  %v1285 = vmul.f32 %v1053, %v1053
  %v1286 = vmul.f32 %v1055, %v1055
  %v1287 = vmul.f32 %v1057, %v1057
  %v1288 = vmul.f32 %v1061, %v1061
  %v1289 = vmul.f32 %v1063, %v1063
  %v1290 = vmul.f32 %v1065, %v1065
  %v1291 = vmul.f32 %v1067, %v1067
  %v1292 = vmul.f32 %v1071, %v1071
  %v1293 = vmul.f32 %v1073, %v1073
  %v1294 = vmul.f32 %v1075, %v1075
  %v1295 = vmul.f32 %v1077, %v1077
  %v1296 = vmul.f32 %v1081, %v1081
  %v1297 = vmul.f32 %v1083, %v1083
  %v1298 = vmul.f32 %v1085, %v1085
  %v1299 = vmul.f32 %v1087, %v1087
  %v1300 = vmul.f32 %v1091, %v1091
  %v1301 = vmul.f32 %v1093, %v1093
  %v1302 = vmul.f32 %v1095, %v1095
  %v1303 = vmul.f32 %v1097, %v1097
  %v1304 = vmul.f32 %v1101, %v1101
  %v1305 = vmul.f32 %v1103, %v1103
  %v1306 = vmul.f32 %v1105, %v1105
  %v1307 = vmul.f32 %v1107, %v1107
  %v1308 = vmul.f32 %v1111, %v1111
  %v1309 = vmul.f32 %v1113, %v1113
  %v1310 = vmul.f32 %v1115, %v1115
  %v1311 = vmul.f32 %v1117, %v1117
  %v1312 = vmul.f32 %v1121, %v1121
  %v1313 = vmul.f32 %v1123, %v1123
  %v1314 = vmul.f32 %v1125, %v1125
  %v1315 = vmul.f32 %v1127, %v1127
  %v1316 = vmul.f32 %v1131, %v1131
  %v1317 = vmul.f32 %v1133, %v1133
  %v1318 = vmul.f32 %v1135, %v1135
  %v1319 = vmul.f32 %v1137, %v1137
  %v1320 = vmul.f32 %v1141, %v1141
  %v1321 = vmul.f32 %v1143, %v1143
  %v1322 = vmul.f32 %v1145, %v1145
  %v1323 = vmul.f32 %v1147, %v1147
  %v1324 = vmul.f32 %v1151, %v1151
  %v1325 = vmul.f32 %v1153, %v1153
  %v1326 = vmul.f32 %v1155, %v1155
  %v1327 = vmul.f32 %v1157, %v1157
  %v1328 = vsel %vm1159, %v1281, 0.0
  %v1329 = vadd.f32 %v1280, %v1328
  %1330 = vadd.xlane.f32.xlu0 %v1329
  %v1331 = vpop.xlane.xlu0 %1330
  %v1332 = vsel %vm1159, %v1283, 0.0
  %v1333 = vadd.f32 %v1282, %v1332
  %1334 = vadd.xlane.f32.xlu0 %v1333
  %v1335 = vpop.xlane.xlu0 %1334
  %v1336 = vsel %vm1159, %v1285, 0.0
  %v1337 = vadd.f32 %v1284, %v1336
  %1338 = vadd.xlane.f32.xlu0 %v1337
  %v1339 = vpop.xlane.xlu0 %1338
  %v1340 = vsel %vm1159, %v1287, 0.0
  %v1341 = vadd.f32 %v1286, %v1340
  %1342 = vadd.xlane.f32.xlu0 %v1341
  %v1343 = vpop.xlane.xlu0 %1342
  %v1344 = vsel %vm1159, %v1289, 0.0
  %v1345 = vadd.f32 %v1288, %v1344
  %1346 = vadd.xlane.f32.xlu0 %v1345
  %v1347 = vpop.xlane.xlu0 %1346
  %v1348 = vsel %vm1159, %v1291, 0.0
  %v1349 = vadd.f32 %v1290, %v1348
  %1350 = vadd.xlane.f32.xlu0 %v1349
  %v1351 = vpop.xlane.xlu0 %1350
  %v1352 = vsel %vm1159, %v1293, 0.0
  %v1353 = vadd.f32 %v1292, %v1352
  %1354 = vadd.xlane.f32.xlu0 %v1353
  %v1355 = vpop.xlane.xlu0 %1354
  %v1356 = vsel %vm1159, %v1295, 0.0
  %v1357 = vadd.f32 %v1294, %v1356
  %1358 = vadd.xlane.f32.xlu0 %v1357
  %v1359 = vpop.xlane.xlu0 %1358
  %v1360 = vsel %vm1159, %v1297, 0.0
  %v1361 = vadd.f32 %v1296, %v1360
  %1362 = vadd.xlane.f32.xlu0 %v1361
  %v1363 = vpop.xlane.xlu0 %1362
  %v1364 = vsel %vm1159, %v1299, 0.0
  %v1365 = vadd.f32 %v1298, %v1364
  %1366 = vadd.xlane.f32.xlu0 %v1365
  %v1367 = vpop.xlane.xlu0 %1366
  %v1368 = vsel %vm1159, %v1301, 0.0
  %v1369 = vadd.f32 %v1300, %v1368
  %1370 = vadd.xlane.f32.xlu0 %v1369
  %v1371 = vpop.xlane.xlu0 %1370
  %v1372 = vsel %vm1159, %v1303, 0.0
  %v1373 = vadd.f32 %v1302, %v1372
  %1374 = vadd.xlane.f32.xlu0 %v1373
  %v1375 = vpop.xlane.xlu0 %1374
  %v1376 = vsel %vm1159, %v1305, 0.0
  %v1377 = vadd.f32 %v1304, %v1376
  %1378 = vadd.xlane.f32.xlu0 %v1377
  %v1379 = vpop.xlane.xlu0 %1378
  %v1380 = vsel %vm1159, %v1307, 0.0
  %v1381 = vadd.f32 %v1306, %v1380
  %1382 = vadd.xlane.f32.xlu0 %v1381
  %v1383 = vpop.xlane.xlu0 %1382
  %v1384 = vsel %vm1159, %v1309, 0.0
  %v1385 = vadd.f32 %v1308, %v1384
  %1386 = vadd.xlane.f32.xlu0 %v1385
  %v1387 = vpop.xlane.xlu0 %1386
  %v1388 = vsel %vm1159, %v1311, 0.0
  %v1389 = vadd.f32 %v1310, %v1388
  %1390 = vadd.xlane.f32.xlu0 %v1389
  %v1391 = vpop.xlane.xlu0 %1390
  %v1392 = vsel %vm1159, %v1313, 0.0
  %v1393 = vadd.f32 %v1312, %v1392
  %1394 = vadd.xlane.f32.xlu0 %v1393
  %v1395 = vpop.xlane.xlu0 %1394
  %v1396 = vsel %vm1159, %v1315, 0.0
  %v1397 = vadd.f32 %v1314, %v1396
  %1398 = vadd.xlane.f32.xlu0 %v1397
  %v1399 = vpop.xlane.xlu0 %1398
  %v1400 = vsel %vm1159, %v1317, 0.0
  %v1401 = vadd.f32 %v1316, %v1400
  %1402 = vadd.xlane.f32.xlu0 %v1401
  %v1403 = vpop.xlane.xlu0 %1402
  %v1404 = vsel %vm1159, %v1319, 0.0
  %v1405 = vadd.f32 %v1318, %v1404
  %1406 = vadd.xlane.f32.xlu0 %v1405
  %v1407 = vpop.xlane.xlu0 %1406
  %v1408 = vsel %vm1159, %v1321, 0.0
  %v1409 = vadd.f32 %v1320, %v1408
  %1410 = vadd.xlane.f32.xlu0 %v1409
  %v1411 = vpop.xlane.xlu0 %1410
  %v1412 = vsel %vm1159, %v1323, 0.0
  %v1413 = vadd.f32 %v1322, %v1412
  %1414 = vadd.xlane.f32.xlu0 %v1413
  %v1415 = vpop.xlane.xlu0 %1414
  %v1416 = vsel %vm1159, %v1325, 0.0
  %v1417 = vadd.f32 %v1324, %v1416
  %1418 = vadd.xlane.f32.xlu0 %v1417
  %v1419 = vpop.xlane.xlu0 %1418
  %v1420 = vsel %vm1159, %v1327, 0.0
  %v1421 = vadd.f32 %v1326, %v1420
  %1422 = vadd.xlane.f32.xlu0 %v1421
  %v1423 = vpop.xlane.xlu0 %1422
  %v1424 = vmul.f32 %v1331, 0.0051020407
  %v1425 = vmul.f32 %v1335, 0.0051020407
  %v1426 = vmul.f32 %v1339, 0.0051020407
  %v1427 = vmul.f32 %v1343, 0.0051020407
  %v1428 = vmul.f32 %v1347, 0.0051020407
  %v1429 = vmul.f32 %v1351, 0.0051020407
  %v1430 = vmul.f32 %v1355, 0.0051020407
  %v1431 = vmul.f32 %v1359, 0.0051020407
  %v1432 = vmul.f32 %v1363, 0.0051020407
  %v1433 = vmul.f32 %v1367, 0.0051020407
  %v1434 = vmul.f32 %v1371, 0.0051020407
  %v1435 = vmul.f32 %v1375, 0.0051020407
  %v1436 = vmul.f32 %v1379, 0.0051020407
  %v1437 = vmul.f32 %v1383, 0.0051020407
  %v1438 = vmul.f32 %v1387, 0.0051020407
  %v1439 = vmul.f32 %v1391, 0.0051020407
  %v1440 = vmul.f32 %v1395, 0.0051020407
  %v1441 = vmul.f32 %v1399, 0.0051020407
  %v1442 = vmul.f32 %v1403, 0.0051020407
  %v1443 = vmul.f32 %v1407, 0.0051020407
  %v1444 = vmul.f32 %v1411, 0.0051020407
  %v1445 = vmul.f32 %v1415, 0.0051020407
  %v1446 = vmul.f32 %v1419, 0.0051020407
  %v1447 = vmul.f32 %v1423, 0.0051020407
  %v1448 = vmul.f32 %v1256, %v1256
  %v1449 = vmul.f32 %v1257, %v1257
  %v1450 = vmul.f32 %v1258, %v1258
  %v1451 = vmul.f32 %v1259, %v1259
  %v1452 = vmul.f32 %v1260, %v1260
  %v1453 = vmul.f32 %v1261, %v1261
  %v1454 = vmul.f32 %v1262, %v1262
  %v1455 = vmul.f32 %v1263, %v1263
  %v1456 = vmul.f32 %v1264, %v1264
  %v1457 = vmul.f32 %v1265, %v1265
  %v1458 = vmul.f32 %v1266, %v1266
  %v1459 = vmul.f32 %v1267, %v1267
  %v1460 = vmul.f32 %v1268, %v1268
  %v1461 = vmul.f32 %v1269, %v1269
  %v1462 = vmul.f32 %v1270, %v1270
  %v1463 = vmul.f32 %v1271, %v1271
  %v1464 = vmul.f32 %v1272, %v1272
  %v1465 = vmul.f32 %v1273, %v1273
  %v1466 = vmul.f32 %v1274, %v1274
  %v1467 = vmul.f32 %v1275, %v1275
  %v1468 = vmul.f32 %v1276, %v1276
  %v1469 = vmul.f32 %v1277, %v1277
  %v1470 = vmul.f32 %v1278, %v1278
  %v1471 = vmul.f32 %v1279, %v1279
  %v1472 = vsub.f32 %v1424, %v1448
  %v1473 = vsub.f32 %v1425, %v1449
  %v1474 = vsub.f32 %v1426, %v1450
  %v1475 = vsub.f32 %v1427, %v1451
  %v1476 = vsub.f32 %v1428, %v1452
  %v1477 = vsub.f32 %v1429, %v1453
  %v1478 = vsub.f32 %v1430, %v1454
  %v1479 = vsub.f32 %v1431, %v1455
  %v1480 = vsub.f32 %v1432, %v1456
  %v1481 = vsub.f32 %v1433, %v1457
  %v1482 = vsub.f32 %v1434, %v1458
  %v1483 = vsub.f32 %v1435, %v1459
  %v1484 = vsub.f32 %v1436, %v1460
  %v1485 = vsub.f32 %v1437, %v1461
  %v1486 = vsub.f32 %v1438, %v1462
  %v1487 = vsub.f32 %v1439, %v1463
  %v1488 = vsub.f32 %v1440, %v1464
  %v1489 = vsub.f32 %v1441, %v1465
  %v1490 = vsub.f32 %v1442, %v1466
  %v1491 = vsub.f32 %v1443, %v1467
  %v1492 = vsub.f32 %v1444, %v1468
  %v1493 = vsub.f32 %v1445, %v1469
  %v1494 = vsub.f32 %v1446, %v1470
  %v1495 = vsub.f32 %v1447, %v1471
  %v1496 = vadd.f32 %v1472, 0.001
  %v1497 = vadd.f32 %v1473, 0.001
  %v1498 = vadd.f32 %v1474, 0.001
  %v1499 = vadd.f32 %v1475, 0.001
  %v1500 = vadd.f32 %v1476, 0.001
  %v1501 = vadd.f32 %v1477, 0.001
  %v1502 = vadd.f32 %v1478, 0.001
  %v1503 = vadd.f32 %v1479, 0.001
  %v1504 = vadd.f32 %v1480, 0.001
  %v1505 = vadd.f32 %v1481, 0.001
  %v1506 = vadd.f32 %v1482, 0.001
  %v1507 = vadd.f32 %v1483, 0.001
  %v1508 = vadd.f32 %v1484, 0.001
  %v1509 = vadd.f32 %v1485, 0.001
  %v1510 = vadd.f32 %v1486, 0.001
  %v1511 = vadd.f32 %v1487, 0.001
  %v1512 = vadd.f32 %v1488, 0.001
  %v1513 = vadd.f32 %v1489, 0.001
  %v1514 = vadd.f32 %v1490, 0.001
  %v1515 = vadd.f32 %v1491, 0.001
  %v1516 = vadd.f32 %v1492, 0.001
  %v1517 = vadd.f32 %v1493, 0.001
  %v1518 = vadd.f32 %v1494, 0.001
  %v1519 = vadd.f32 %v1495, 0.001
  %v1520 = vrsqrt.pop %v1496
  %v1521 = vrsqrt.pop %v1497
  %v1522 = vrsqrt.pop %v1498
  %v1523 = vrsqrt.pop %v1499
  %v1524 = vrsqrt.pop %v1500
  %v1525 = vrsqrt.pop %v1501
  %v1526 = vrsqrt.pop %v1502
  %v1527 = vrsqrt.pop %v1503
  %v1528 = vrsqrt.pop %v1504
  %v1529 = vrsqrt.pop %v1505
  %v1530 = vrsqrt.pop %v1506
  %v1531 = vrsqrt.pop %v1507
  %v1532 = vrsqrt.pop %v1508
  %v1533 = vrsqrt.pop %v1509
  %v1534 = vrsqrt.pop %v1510
  %v1535 = vrsqrt.pop %v1511
  %v1536 = vrsqrt.pop %v1512
  %v1537 = vrsqrt.pop %v1513
  %v1538 = vrsqrt.pop %v1514
  %v1539 = vrsqrt.pop %v1515
  %v1540 = vrsqrt.pop %v1516
  %v1541 = vrsqrt.pop %v1517
  %v1542 = vrsqrt.pop %v1518
  %v1543 = vrsqrt.pop %v1519
  %v1544 = vld [vmem:[%s3] sm:$0xff]
  %v1545 = vld [vmem:[%s3 + $0x8] sm:$0xff]
  %v1546 = vld [vmem:[%s3 + $0x10] sm:$0xff]
  %v1547 = vld [vmem:[%s3 + $0x18] sm:$0xff]
  %v1548 = vld [vmem:[%s3 + $0x20] sm:$0xff]
  %v1549 = vld [vmem:[%s3 + $0x28] sm:$0xff]
  %v1550 = vld [vmem:[%s3 + $0x30] sm:$0xff]
  %v1551 = vld [vmem:[%s3 + $0x38] sm:$0xff]
  %v1552 = vld [vmem:[%s3 + $0x40] sm:$0xff]
  %v1553 = vld [vmem:[%s3 + $0x48] sm:$0xff]
  %v1554 = vld [vmem:[%s3 + $0x50] sm:$0xff]
  %v1555 = vld [vmem:[%s3 + $0x58] sm:$0xff]
  %v1556 = vld [vmem:[%s3 + $0x60] sm:$0xff]
  %v1557 = vld [vmem:[%s3 + $0x68] sm:$0xff]
  %v1558 = vld [vmem:[%s3 + $0x70] sm:$0xff]
  %v1559 = vld [vmem:[%s3 + $0x78] sm:$0xff]
  %v1560 = vld [vmem:[%s3 + $0x80] sm:$0xff]
  %v1561 = vld [vmem:[%s3 + $0x88] sm:$0xff]
  %v1562 = vld [vmem:[%s3 + $0x90] sm:$0xff]
  %v1563 = vld [vmem:[%s3 + $0x98] sm:$0xff]
  %v1564 = vld [vmem:[%s3 + $0xa0] sm:$0xff]
  %v1565 = vld [vmem:[%s3 + $0xa8] sm:$0xff]
  %v1566 = vld [vmem:[%s3 + $0xb0] sm:$0xff]
  %v1567 = vld [vmem:[%s3 + $0xb8] sm:$0xff]
  %v1568 = vmul.f32 %v1520, %v1544
  %v1569 = vmul.f32 %v1521, %v1545
  %v1570 = vmul.f32 %v1522, %v1546
  %v1571 = vmul.f32 %v1523, %v1547
  %v1572 = vmul.f32 %v1524, %v1548
  %v1573 = vmul.f32 %v1525, %v1549
  %v1574 = vmul.f32 %v1526, %v1550
  %v1575 = vmul.f32 %v1527, %v1551
  %v1576 = vmul.f32 %v1528, %v1552
  %v1577 = vmul.f32 %v1529, %v1553
  %v1578 = vmul.f32 %v1530, %v1554
  %v1579 = vmul.f32 %v1531, %v1555
  %v1580 = vmul.f32 %v1532, %v1556
  %v1581 = vmul.f32 %v1533, %v1557
  %v1582 = vmul.f32 %v1534, %v1558
  %v1583 = vmul.f32 %v1535, %v1559
  %v1584 = vmul.f32 %v1536, %v1560
  %v1585 = vmul.f32 %v1537, %v1561
  %v1586 = vmul.f32 %v1538, %v1562
  %v1587 = vmul.f32 %v1539, %v1563
  %v1588 = vmul.f32 %v1540, %v1564
  %v1589 = vmul.f32 %v1541, %v1565
  %v1590 = vmul.f32 %v1542, %v1566
  %v1591 = vmul.f32 %v1543, %v1567
  %v1592 = vsub.f32 %v1041, %v1256
  %v1593 = vsub.f32 %v1043, %v1256
  %v1594 = vsub.f32 %v1045, %v1257
  %v1595 = vsub.f32 %v1047, %v1257
  %v1596 = vsub.f32 %v1051, %v1258
  %v1597 = vsub.f32 %v1053, %v1258
  %v1598 = vsub.f32 %v1055, %v1259
  %v1599 = vsub.f32 %v1057, %v1259
  %v1600 = vsub.f32 %v1061, %v1260
  %v1601 = vsub.f32 %v1063, %v1260
  %v1602 = vsub.f32 %v1065, %v1261
  %v1603 = vsub.f32 %v1067, %v1261
  %v1604 = vsub.f32 %v1071, %v1262
  %v1605 = vsub.f32 %v1073, %v1262
  %v1606 = vsub.f32 %v1075, %v1263
  %v1607 = vsub.f32 %v1077, %v1263
  %v1608 = vsub.f32 %v1081, %v1264
  %v1609 = vsub.f32 %v1083, %v1264
  %v1610 = vsub.f32 %v1085, %v1265
  %v1611 = vsub.f32 %v1087, %v1265
  %v1612 = vsub.f32 %v1091, %v1266
  %v1613 = vsub.f32 %v1093, %v1266
  %v1614 = vsub.f32 %v1095, %v1267
  %v1615 = vsub.f32 %v1097, %v1267
  %v1616 = vsub.f32 %v1101, %v1268
  %v1617 = vsub.f32 %v1103, %v1268
  %v1618 = vsub.f32 %v1105, %v1269
  %v1619 = vsub.f32 %v1107, %v1269
  %v1620 = vsub.f32 %v1111, %v1270
  %v1621 = vsub.f32 %v1113, %v1270
  %v1622 = vsub.f32 %v1115, %v1271
  %v1623 = vsub.f32 %v1117, %v1271
  %v1624 = vsub.f32 %v1121, %v1272
  %v1625 = vsub.f32 %v1123, %v1272
  %v1626 = vsub.f32 %v1125, %v1273
  %v1627 = vsub.f32 %v1127, %v1273
  %v1628 = vsub.f32 %v1131, %v1274
  %v1629 = vsub.f32 %v1133, %v1274
  %v1630 = vsub.f32 %v1135, %v1275
  %v1631 = vsub.f32 %v1137, %v1275
  %v1632 = vsub.f32 %v1141, %v1276
  %v1633 = vsub.f32 %v1143, %v1276
  %v1634 = vsub.f32 %v1145, %v1277
  %v1635 = vsub.f32 %v1147, %v1277
  %v1636 = vsub.f32 %v1151, %v1278
  %v1637 = vsub.f32 %v1153, %v1278
  %v1638 = vsub.f32 %v1155, %v1279
  %v1639 = vsub.f32 %v1157, %v1279
  %1641 = vset.pattern.permute.xlu0 0
  %1642 = vperm.xlu0 %1641, %v1568
  %v1643 = vpop.permute.xlu0 %1642
  %1646 = vset.pattern.permute.xlu0 0
  %1647 = vperm.xlu0 %1646, %v1569
  %v1648 = vpop.permute.xlu0 %1647
  %1651 = vset.pattern.permute.xlu0 0
  %1652 = vperm.xlu0 %1651, %v1570
  %v1653 = vpop.permute.xlu0 %1652
  %1656 = vset.pattern.permute.xlu0 0
  %1657 = vperm.xlu0 %1656, %v1571
  %v1658 = vpop.permute.xlu0 %1657
  %1661 = vset.pattern.permute.xlu0 0
  %1662 = vperm.xlu0 %1661, %v1572
  %v1663 = vpop.permute.xlu0 %1662
  %1666 = vset.pattern.permute.xlu0 0
  %1667 = vperm.xlu0 %1666, %v1573
  %v1668 = vpop.permute.xlu0 %1667
  %1671 = vset.pattern.permute.xlu0 0
  %1672 = vperm.xlu0 %1671, %v1574
  %v1673 = vpop.permute.xlu0 %1672
  %1676 = vset.pattern.permute.xlu0 0
  %1677 = vperm.xlu0 %1676, %v1575
  %v1678 = vpop.permute.xlu0 %1677
  %1681 = vset.pattern.permute.xlu0 0
  %1682 = vperm.xlu0 %1681, %v1576
  %v1683 = vpop.permute.xlu0 %1682
  %1686 = vset.pattern.permute.xlu0 0
  %1687 = vperm.xlu0 %1686, %v1577
  %v1688 = vpop.permute.xlu0 %1687
  %1691 = vset.pattern.permute.xlu0 0
  %1692 = vperm.xlu0 %1691, %v1578
  %v1693 = vpop.permute.xlu0 %1692
  %1696 = vset.pattern.permute.xlu0 0
  %1697 = vperm.xlu0 %1696, %v1579
  %v1698 = vpop.permute.xlu0 %1697
  %1701 = vset.pattern.permute.xlu0 0
  %1702 = vperm.xlu0 %1701, %v1580
  %v1703 = vpop.permute.xlu0 %1702
  %1706 = vset.pattern.permute.xlu0 0
  %1707 = vperm.xlu0 %1706, %v1581
  %v1708 = vpop.permute.xlu0 %1707
  %1711 = vset.pattern.permute.xlu0 0
  %1712 = vperm.xlu0 %1711, %v1582
  %v1713 = vpop.permute.xlu0 %1712
  %1716 = vset.pattern.permute.xlu0 0
  %1717 = vperm.xlu0 %1716, %v1583
  %v1718 = vpop.permute.xlu0 %1717
  %1721 = vset.pattern.permute.xlu0 0
  %1722 = vperm.xlu0 %1721, %v1584
  %v1723 = vpop.permute.xlu0 %1722
  %1726 = vset.pattern.permute.xlu0 0
  %1727 = vperm.xlu0 %1726, %v1585
  %v1728 = vpop.permute.xlu0 %1727
  %1731 = vset.pattern.permute.xlu0 0
  %1732 = vperm.xlu0 %1731, %v1586
  %v1733 = vpop.permute.xlu0 %1732
  %1736 = vset.pattern.permute.xlu0 0
  %1737 = vperm.xlu0 %1736, %v1587
  %v1738 = vpop.permute.xlu0 %1737
  %1741 = vset.pattern.permute.xlu0 0
  %1742 = vperm.xlu0 %1741, %v1588
  %v1743 = vpop.permute.xlu0 %1742
  %1746 = vset.pattern.permute.xlu0 0
  %1747 = vperm.xlu0 %1746, %v1589
  %v1748 = vpop.permute.xlu0 %1747
  %1751 = vset.pattern.permute.xlu0 0
  %1752 = vperm.xlu0 %1751, %v1590
  %v1753 = vpop.permute.xlu0 %1752
  %1756 = vset.pattern.permute.xlu0 0
  %1757 = vperm.xlu0 %1756, %v1591
  %v1758 = vpop.permute.xlu0 %1757
  %v1760 = vmul.f32 %v1592, %v1643
  %v1761 = vmul.f32 %v1593, %v1643
  %v1762 = vmul.f32 %v1594, %v1648
  %v1763 = vmul.f32 %v1595, %v1648
  %v1764 = vmul.f32 %v1596, %v1653
  %v1765 = vmul.f32 %v1597, %v1653
  %v1766 = vmul.f32 %v1598, %v1658
  %v1767 = vmul.f32 %v1599, %v1658
  %v1768 = vmul.f32 %v1600, %v1663
  %v1769 = vmul.f32 %v1601, %v1663
  %v1770 = vmul.f32 %v1602, %v1668
  %v1771 = vmul.f32 %v1603, %v1668
  %v1772 = vmul.f32 %v1604, %v1673
  %v1773 = vmul.f32 %v1605, %v1673
  %v1774 = vmul.f32 %v1606, %v1678
  %v1775 = vmul.f32 %v1607, %v1678
  %v1776 = vmul.f32 %v1608, %v1683
  %v1777 = vmul.f32 %v1609, %v1683
  %v1778 = vmul.f32 %v1610, %v1688
  %v1779 = vmul.f32 %v1611, %v1688
  %v1780 = vmul.f32 %v1612, %v1693
  %v1781 = vmul.f32 %v1613, %v1693
  %v1782 = vmul.f32 %v1614, %v1698
  %v1783 = vmul.f32 %v1615, %v1698
  %v1784 = vmul.f32 %v1616, %v1703
  %v1785 = vmul.f32 %v1617, %v1703
  %v1786 = vmul.f32 %v1618, %v1708
  %v1787 = vmul.f32 %v1619, %v1708
  %v1788 = vmul.f32 %v1620, %v1713
  %v1789 = vmul.f32 %v1621, %v1713
  %v1790 = vmul.f32 %v1622, %v1718
  %v1791 = vmul.f32 %v1623, %v1718
  %v1792 = vmul.f32 %v1624, %v1723
  %v1793 = vmul.f32 %v1625, %v1723
  %v1794 = vmul.f32 %v1626, %v1728
  %v1795 = vmul.f32 %v1627, %v1728
  %v1796 = vmul.f32 %v1628, %v1733
  %v1797 = vmul.f32 %v1629, %v1733
  %v1798 = vmul.f32 %v1630, %v1738
  %v1799 = vmul.f32 %v1631, %v1738
  %v1800 = vmul.f32 %v1632, %v1743
  %v1801 = vmul.f32 %v1633, %v1743
  %v1802 = vmul.f32 %v1634, %v1748
  %v1803 = vmul.f32 %v1635, %v1748
  %v1804 = vmul.f32 %v1636, %v1753
  %v1805 = vmul.f32 %v1637, %v1753
  %v1806 = vmul.f32 %v1638, %v1758
  %v1807 = vmul.f32 %v1639, %v1758
  %v1808 = vld [vmem:[%s4] sm:$0xff]
  %v1809 = vld [vmem:[%s4 + $0x8] sm:$0xff]
  %v1810 = vld [vmem:[%s4 + $0x10] sm:$0xff]
  %v1811 = vld [vmem:[%s4 + $0x18] sm:$0xff]
  %v1812 = vld [vmem:[%s4 + $0x20] sm:$0xff]
  %v1813 = vld [vmem:[%s4 + $0x28] sm:$0xff]
  %v1814 = vld [vmem:[%s4 + $0x30] sm:$0xff]
  %v1815 = vld [vmem:[%s4 + $0x38] sm:$0xff]
  %v1816 = vld [vmem:[%s4 + $0x40] sm:$0xff]
  %v1817 = vld [vmem:[%s4 + $0x48] sm:$0xff]
  %v1818 = vld [vmem:[%s4 + $0x50] sm:$0xff]
  %v1819 = vld [vmem:[%s4 + $0x58] sm:$0xff]
  %v1820 = vld [vmem:[%s4 + $0x60] sm:$0xff]
  %v1821 = vld [vmem:[%s4 + $0x68] sm:$0xff]
  %v1822 = vld [vmem:[%s4 + $0x70] sm:$0xff]
  %v1823 = vld [vmem:[%s4 + $0x78] sm:$0xff]
  %v1824 = vld [vmem:[%s4 + $0x80] sm:$0xff]
  %v1825 = vld [vmem:[%s4 + $0x88] sm:$0xff]
  %v1826 = vld [vmem:[%s4 + $0x90] sm:$0xff]
  %v1827 = vld [vmem:[%s4 + $0x98] sm:$0xff]
  %v1828 = vld [vmem:[%s4 + $0xa0] sm:$0xff]
  %v1829 = vld [vmem:[%s4 + $0xa8] sm:$0xff]
  %v1830 = vld [vmem:[%s4 + $0xb0] sm:$0xff]
  %v1831 = vld [vmem:[%s4 + $0xb8] sm:$0xff]
  %1833 = vset.pattern.permute.xlu0 0
  %1834 = vperm.xlu0 %1833, %v1808
  %v1835 = vpop.permute.xlu0 %1834
  %1838 = vset.pattern.permute.xlu0 0
  %1839 = vperm.xlu0 %1838, %v1809
  %v1840 = vpop.permute.xlu0 %1839
  %1843 = vset.pattern.permute.xlu0 0
  %1844 = vperm.xlu0 %1843, %v1810
  %v1845 = vpop.permute.xlu0 %1844
  %1848 = vset.pattern.permute.xlu0 0
  %1849 = vperm.xlu0 %1848, %v1811
  %v1850 = vpop.permute.xlu0 %1849
  %1853 = vset.pattern.permute.xlu0 0
  %1854 = vperm.xlu0 %1853, %v1812
  %v1855 = vpop.permute.xlu0 %1854
  %1858 = vset.pattern.permute.xlu0 0
  %1859 = vperm.xlu0 %1858, %v1813
  %v1860 = vpop.permute.xlu0 %1859
  %1863 = vset.pattern.permute.xlu0 0
  %1864 = vperm.xlu0 %1863, %v1814
  %v1865 = vpop.permute.xlu0 %1864
  %1868 = vset.pattern.permute.xlu0 0
  %1869 = vperm.xlu0 %1868, %v1815
  %v1870 = vpop.permute.xlu0 %1869
  %1873 = vset.pattern.permute.xlu0 0
  %1874 = vperm.xlu0 %1873, %v1816
  %v1875 = vpop.permute.xlu0 %1874
  %1878 = vset.pattern.permute.xlu0 0
  %1879 = vperm.xlu0 %1878, %v1817
  %v1880 = vpop.permute.xlu0 %1879
  %1883 = vset.pattern.permute.xlu0 0
  %1884 = vperm.xlu0 %1883, %v1818
  %v1885 = vpop.permute.xlu0 %1884
  %1888 = vset.pattern.permute.xlu0 0
  %1889 = vperm.xlu0 %1888, %v1819
  %v1890 = vpop.permute.xlu0 %1889
  %1893 = vset.pattern.permute.xlu0 0
  %1894 = vperm.xlu0 %1893, %v1820
  %v1895 = vpop.permute.xlu0 %1894
  %1898 = vset.pattern.permute.xlu0 0
  %1899 = vperm.xlu0 %1898, %v1821
  %v1900 = vpop.permute.xlu0 %1899
  %1903 = vset.pattern.permute.xlu0 0
  %1904 = vperm.xlu0 %1903, %v1822
  %v1905 = vpop.permute.xlu0 %1904
  %1908 = vset.pattern.permute.xlu0 0
  %1909 = vperm.xlu0 %1908, %v1823
  %v1910 = vpop.permute.xlu0 %1909
  %1913 = vset.pattern.permute.xlu0 0
  %1914 = vperm.xlu0 %1913, %v1824
  %v1915 = vpop.permute.xlu0 %1914
  %1918 = vset.pattern.permute.xlu0 0
  %1919 = vperm.xlu0 %1918, %v1825
  %v1920 = vpop.permute.xlu0 %1919
  %1923 = vset.pattern.permute.xlu0 0
  %1924 = vperm.xlu0 %1923, %v1826
  %v1925 = vpop.permute.xlu0 %1924
  %1928 = vset.pattern.permute.xlu0 0
  %1929 = vperm.xlu0 %1928, %v1827
  %v1930 = vpop.permute.xlu0 %1929
  %1933 = vset.pattern.permute.xlu0 0
  %1934 = vperm.xlu0 %1933, %v1828
  %v1935 = vpop.permute.xlu0 %1934
  %1938 = vset.pattern.permute.xlu0 0
  %1939 = vperm.xlu0 %1938, %v1829
  %v1940 = vpop.permute.xlu0 %1939
  %1943 = vset.pattern.permute.xlu0 0
  %1944 = vperm.xlu0 %1943, %v1830
  %v1945 = vpop.permute.xlu0 %1944
  %1948 = vset.pattern.permute.xlu0 0
  %1949 = vperm.xlu0 %1948, %v1831
  %v1950 = vpop.permute.xlu0 %1949
  %v1952 = vadd.f32 %v1760, %v1835
  %v1953 = vadd.f32 %v1761, %v1835
  %v1954 = vadd.f32 %v1762, %v1840
  %v1955 = vadd.f32 %v1763, %v1840
  %v1956 = vadd.f32 %v1764, %v1845
  %v1957 = vadd.f32 %v1765, %v1845
  %v1958 = vadd.f32 %v1766, %v1850
  %v1959 = vadd.f32 %v1767, %v1850
  %v1960 = vadd.f32 %v1768, %v1855
  %v1961 = vadd.f32 %v1769, %v1855
  %v1962 = vadd.f32 %v1770, %v1860
  %v1963 = vadd.f32 %v1771, %v1860
  %v1964 = vadd.f32 %v1772, %v1865
  %v1965 = vadd.f32 %v1773, %v1865
  %v1966 = vadd.f32 %v1774, %v1870
  %v1967 = vadd.f32 %v1775, %v1870
  %v1968 = vadd.f32 %v1776, %v1875
  %v1969 = vadd.f32 %v1777, %v1875
  %v1970 = vadd.f32 %v1778, %v1880
  %v1971 = vadd.f32 %v1779, %v1880
  %v1972 = vadd.f32 %v1780, %v1885
  %v1973 = vadd.f32 %v1781, %v1885
  %v1974 = vadd.f32 %v1782, %v1890
  %v1975 = vadd.f32 %v1783, %v1890
  %v1976 = vadd.f32 %v1784, %v1895
  %v1977 = vadd.f32 %v1785, %v1895
  %v1978 = vadd.f32 %v1786, %v1900
  %v1979 = vadd.f32 %v1787, %v1900
  %v1980 = vadd.f32 %v1788, %v1905
  %v1981 = vadd.f32 %v1789, %v1905
  %v1982 = vadd.f32 %v1790, %v1910
  %v1983 = vadd.f32 %v1791, %v1910
  %v1984 = vadd.f32 %v1792, %v1915
  %v1985 = vadd.f32 %v1793, %v1915
  %v1986 = vadd.f32 %v1794, %v1920
  %v1987 = vadd.f32 %v1795, %v1920
  %v1988 = vadd.f32 %v1796, %v1925
  %v1989 = vadd.f32 %v1797, %v1925
  %v1990 = vadd.f32 %v1798, %v1930
  %v1991 = vadd.f32 %v1799, %v1930
  %v1992 = vadd.f32 %v1800, %v1935
  %v1993 = vadd.f32 %v1801, %v1935
  %v1994 = vadd.f32 %v1802, %v1940
  %v1995 = vadd.f32 %v1803, %v1940
  %v1996 = vadd.f32 %v1804, %v1945
  %v1997 = vadd.f32 %v1805, %v1945
  %v1998 = vadd.f32 %v1806, %v1950
  %v1999 = vadd.f32 %v1807, %v1950
  %2000 = vst [vmem:[%s5] sm:$0xff] %v1952
  %2001 = vst.msk [vmem:[%s5 + $0x8] sm:$0xff] %vm1159, %v1953
  %2002 = vst [vmem:[%s5 + $0x10] sm:$0xff] %v1954
  %2003 = vst.msk [vmem:[%s5 + $0x18] sm:$0xff] %vm1159, %v1955
  %2004 = vst [vmem:[%s5 + $0x20] sm:$0xff] %v1956
  %2005 = vst.msk [vmem:[%s5 + $0x28] sm:$0xff] %vm1159, %v1957
  %2006 = vst [vmem:[%s5 + $0x30] sm:$0xff] %v1958
  %2007 = vst.msk [vmem:[%s5 + $0x38] sm:$0xff] %vm1159, %v1959
  %2008 = vst [vmem:[%s5 + $0x40] sm:$0xff] %v1960
  %2009 = vst.msk [vmem:[%s5 + $0x48] sm:$0xff] %vm1159, %v1961
  %2010 = vst [vmem:[%s5 + $0x50] sm:$0xff] %v1962
  %2011 = vst.msk [vmem:[%s5 + $0x58] sm:$0xff] %vm1159, %v1963
  %2012 = vst [vmem:[%s5 + $0x60] sm:$0xff] %v1964
  %2013 = vst.msk [vmem:[%s5 + $0x68] sm:$0xff] %vm1159, %v1965
  %2014 = vst [vmem:[%s5 + $0x70] sm:$0xff] %v1966
  %2015 = vst.msk [vmem:[%s5 + $0x78] sm:$0xff] %vm1159, %v1967
  %2016 = vst [vmem:[%s5 + $0x80] sm:$0xff] %v1968
  %2017 = vst.msk [vmem:[%s5 + $0x88] sm:$0xff] %vm1159, %v1969
  %2018 = vst [vmem:[%s5 + $0x90] sm:$0xff] %v1970
  %2019 = vst.msk [vmem:[%s5 + $0x98] sm:$0xff] %vm1159, %v1971
  %2020 = vst [vmem:[%s5 + $0xa0] sm:$0xff] %v1972
  %2021 = vst.msk [vmem:[%s5 + $0xa8] sm:$0xff] %vm1159, %v1973
  %2022 = vst [vmem:[%s5 + $0xb0] sm:$0xff] %v1974
  %2023 = vst.msk [vmem:[%s5 + $0xb8] sm:$0xff] %vm1159, %v1975
  %2024 = vst [vmem:[%s5 + $0xc0] sm:$0xff] %v1976
  %2025 = vst.msk [vmem:[%s5 + $0xc8] sm:$0xff] %vm1159, %v1977
  %2026 = vst [vmem:[%s5 + $0xd0] sm:$0xff] %v1978
  %2027 = vst.msk [vmem:[%s5 + $0xd8] sm:$0xff] %vm1159, %v1979
  %2028 = vst [vmem:[%s5 + $0xe0] sm:$0xff] %v1980
  %2029 = vst.msk [vmem:[%s5 + $0xe8] sm:$0xff] %vm1159, %v1981
  %2030 = vst [vmem:[%s5 + $0xf0] sm:$0xff] %v1982
  %2031 = vst.msk [vmem:[%s5 + $0xf8] sm:$0xff] %vm1159, %v1983
  %2032 = vst [vmem:[%s5 + $0x100] sm:$0xff] %v1984
  %2033 = vst.msk [vmem:[%s5 + $0x108] sm:$0xff] %vm1159, %v1985
  %2034 = vst [vmem:[%s5 + $0x110] sm:$0xff] %v1986
  %2035 = vst.msk [vmem:[%s5 + $0x118] sm:$0xff] %vm1159, %v1987
  %2036 = vst [vmem:[%s5 + $0x120] sm:$0xff] %v1988
  %2037 = vst.msk [vmem:[%s5 + $0x128] sm:$0xff] %vm1159, %v1989
  %2038 = vst [vmem:[%s5 + $0x130] sm:$0xff] %v1990
  %2039 = vst.msk [vmem:[%s5 + $0x138] sm:$0xff] %vm1159, %v1991
  %2040 = vst [vmem:[%s5 + $0x140] sm:$0xff] %v1992
  %2041 = vst.msk [vmem:[%s5 + $0x148] sm:$0xff] %vm1159, %v1993
  %2042 = vst [vmem:[%s5 + $0x150] sm:$0xff] %v1994
  %2043 = vst.msk [vmem:[%s5 + $0x158] sm:$0xff] %vm1159, %v1995
  %2044 = vst [vmem:[%s5 + $0x160] sm:$0xff] %v1996
  %2045 = vst.msk [vmem:[%s5 + $0x168] sm:$0xff] %vm1159, %v1997
  %2046 = vst [vmem:[%s5 + $0x170] sm:$0xff] %v1998
  %2047 = vst.msk [vmem:[%s5 + $0x178] sm:$0xff] %vm1159, %v1999
  // Predicated region
  $region22: #{fused_mul_conv_bn.1} parent=0 // pred_check
    _
  $region23: #{fused_mul_conv_bn.1} parent=0 // pred_check_branch
    %2049 = sbr.rel (0) target = $region25
  $region24: #{fused_mul_conv_bn.1} parent=0 // pred_region
    _
  $region25: #{fused_mul_conv_bn.1} parent=0 // pred_fallthru
    _
  // Predicated region
  $region26: #{fused_mul_conv_bn.1} parent=0 // pred_check
    _
  $region27: #{fused_mul_conv_bn.1} parent=0 // pred_check_branch
    %2051 = sbr.rel (0) target = $region29
  $region28: #{fused_mul_conv_bn.1} parent=0 // pred_region
    _
  $region29: #{fused_mul_conv_bn.1} parent=0 // pred_fallthru
    _

</llo_original>
